<compile_context>
chip_gen: v6e
topology: v6e:2x2x1
jax: 0.10.0
libtpu: 0.0.40
codegen_flags: <defaults>
</compile_context>

<pallas_src>
import functools

import jax
import jax.numpy as jnp
from jax.experimental import pallas as pl
from jax.experimental.pallas import tpu as pltpu

_LANE = 128      # lane (last-dim) granule
_SUBLANE = 8     # sublane granule (f32)


def _round_up(x, m):
    return (x + m - 1) // m * m


def _pad2d(x, rows, cols):
    r, c = x.shape
    return jnp.pad(x, ((0, rows - r), (0, cols - c)))


def _vmem_limit_bytes():
    """Generation-aware VMEM budget: physical capacity minus ~16 MiB headroom."""
    try:
        cap = int(pltpu.get_tpu_info().vmem_capacity_bytes)
    except Exception:
        cap = 64 * 1024 * 1024          # conservative (v7x-sized) fallback
    return int(min(max(cap - 16 * 1024 * 1024, 32 * 1024 * 1024), 112 * 1024 * 1024))


# ---------------------------------------------------------------------------
# Kernel 1 (general tiled path): one fused GCNConv layer
#   out = act(A_hat @ (X @ W) + b)             (intermediate layers)
#   out = (A_hat @ (X @ W) + b) @ Wh + bh      (last layer, heads fused)
# ---------------------------------------------------------------------------
def _gcn_layer_kernel(a_ref, x_ref, w_ref, b_ref, *rest, relu, fuse_heads):
    if fuse_heads:
        hw_ref, hb_ref, o_ref, acc_ref = rest
    else:
        o_ref, acc_ref = rest
    k = pl.program_id(1)

    @pl.when(k == 0)
    def _init():
        acc_ref[...] = jnp.zeros_like(acc_ref)

    # Feature contraction for this k-slab, computed on the fly in f32 and never
    # written to HBM; W is VMEM-resident across the whole grid.
    xw = jnp.dot(x_ref[...], w_ref[...], preferred_element_type=jnp.float32)
    # Propagation: accumulate A[i, k] @ XW_k into the f32 scratch.
    acc_ref[...] += jnp.dot(a_ref[...], xw.astype(a_ref.dtype),
                            preferred_element_type=jnp.float32)

    @pl.when(k == pl.num_programs(1) - 1)
    def _finalize():
        h = acc_ref[...] + b_ref[...]
        if relu:
            h = jnp.maximum(h, 0.0)
        if fuse_heads:
            # All heads at once: lane-dense (tm, num_nodes*Cp) output.
            logits = jnp.dot(h.astype(hw_ref.dtype), hw_ref[...],
                             preferred_element_type=jnp.float32) + hb_ref[...]
            o_ref[...] = logits.astype(o_ref.dtype)
        else:
            # NOTE: padded ROWS receive bias(+ReLU) garbage here.  This is safe
            # only because the padded COLUMNS of A_hat are zero (garbage rows of
            # the next layer's X never contaminate valid rows) and the final
            # [:n_total] slice drops them.  Keep A zero-padded.
            o_ref[...] = h.astype(o_ref.dtype)


def gcn_layer(a_p, x_p, w_p, b_p, *, relu, tm, tk, vmem_limit,
              head_w=None, head_b=None, out_dtype=jnp.bfloat16):
    n_pad = a_p.shape[0]
    fin_p = x_p.shape[1]
    fout_p = w_p.shape[1]
    n_m, n_k = n_pad // tm, n_pad // tk
    fuse_heads = head_w is not None
    n_out = head_w.shape[1] if fuse_heads else fout_p

    in_specs = [
        pl.BlockSpec((tm, tk), lambda i, k: (i, k)),           # A_hat tile
        pl.BlockSpec((tk, fin_p), lambda i, k: (k, 0)),        # X slab for this k
        pl.BlockSpec((fin_p, fout_p), lambda i, k: (0, 0)),    # W, VMEM-resident
        pl.BlockSpec((1, fout_p), lambda i, k: (0, 0)),        # bias
    ]
    args = [a_p, x_p, w_p, b_p]
    if fuse_heads:
        in_specs += [
            pl.BlockSpec((fout_p, n_out), lambda i, k: (0, 0)),  # head W, resident
            pl.BlockSpec((1, n_out), lambda i, k: (0, 0)),       # head bias
        ]
        args += [head_w, head_b]

    flops = 2 * n_pad * n_pad * fout_p + 2 * n_m * n_pad * fin_p * fout_p
    if fuse_heads:
        flops += 2 * n_pad * fout_p * n_out
    bytes_accessed = (int(a_p.size) * a_p.dtype.itemsize
                      + n_m * int(x_p.size) * x_p.dtype.itemsize
                      + int(w_p.size) * w_p.dtype.itemsize
                      + int(b_p.size) * b_p.dtype.itemsize
                      + n_pad * n_out * jnp.dtype(out_dtype).itemsize)

    return pl.pallas_call(
        functools.partial(_gcn_layer_kernel, relu=relu, fuse_heads=fuse_heads),
        out_shape=jax.ShapeDtypeStruct((n_pad, n_out), out_dtype),
        grid_spec=pltpu.PrefetchScalarGridSpec(
            num_scalar_prefetch=0,
            grid=(n_m, n_k),                                   # reduction axis last
            in_specs=in_specs,
            out_specs=pl.BlockSpec((tm, n_out), lambda i, k: (i, 0)),
            scratch_shapes=[pltpu.VMEM((tm, fout_p), jnp.float32)],
        ),
        compiler_params=pltpu.CompilerParams(
            dimension_semantics=("parallel", "arbitrary"),     # rows shard across TCs
            vmem_limit_bytes=vmem_limit,
        ),
        # TODO(synk): if a trace shows exposed DMA on the A tile at large tm,
        # add pipeline_mode=pl.Buffered(3) to the A BlockSpec.
        cost_estimate=pl.CostEstimate(
            flops=int(flops), transcendentals=0, bytes_accessed=int(bytes_accessed)),
    )(*args)


# ---------------------------------------------------------------------------
# Kernel 2 (small-graph path): whole forward (all conv layers + heads),
# grid=(1,), every operand VMEM-resident.
# ---------------------------------------------------------------------------
def _gcn_fused_small_kernel(a_ref, x_ref, *rest, num_layers):
    conv_refs = rest[:2 * num_layers]
    hw_ref = rest[2 * num_layers]
    hb_ref = rest[2 * num_layers + 1]
    o_ref = rest[2 * num_layers + 2]

    a = a_ref[...]
    h = x_ref[...]
    for li in range(num_layers):
        w = conv_refs[2 * li][...]
        b = conv_refs[2 * li + 1][...]
        xw = jnp.dot(h, w, preferred_element_type=jnp.float32)
        h32 = jnp.dot(a, xw.astype(a.dtype), preferred_element_type=jnp.float32) + b
        if li < num_layers - 1:
            h32 = jnp.maximum(h32, 0.0)     # dropout p=0.0 / eval -> no-op
        h = h32.astype(x_ref.dtype)
    o_ref[...] = (jnp.dot(h, hw_ref[...], preferred_element_type=jnp.float32)
                  + hb_ref[...]).astype(o_ref.dtype)


def gcn_fused_small(a_p, x_p, conv_w_p, conv_b_p, head_w, head_b, *, vmem_limit):
    num_layers = len(conv_w_p)
    n_pad = a_p.shape[0]
    nn_cp = head_w.shape[1]

    args = [a_p, x_p]
    in_specs = [pl.BlockSpec(a_p.shape, lambda i: (0, 0)),
                pl.BlockSpec(x_p.shape, lambda i: (0, 0))]
    for li in range(num_layers):
        args += [conv_w_p[li], conv_b_p[li]]
        in_specs += [pl.BlockSpec(conv_w_p[li].shape, lambda i: (0, 0)),
                     pl.BlockSpec(conv_b_p[li].shape, lambda i: (0, 0))]
    args += [head_w, head_b]
    in_specs += [pl.BlockSpec(head_w.shape, lambda i: (0, 0)),
                 pl.BlockSpec(head_b.shape, lambda i: (0, 0))]

    hid_p = conv_w_p[-1].shape[1]
    flops = sum(2 * n_pad * w.shape[0] * w.shape[1] + 2 * n_pad * n_pad * w.shape[1]
                for w in conv_w_p) + 2 * n_pad * hid_p * nn_cp
    bytes_accessed = (sum(int(a.size) * a.dtype.itemsize for a in args)
                      + n_pad * nn_cp * 4)

    return pl.pallas_call(
        functools.partial(_gcn_fused_small_kernel, num_layers=num_layers),
        out_shape=jax.ShapeDtypeStruct((n_pad, nn_cp), jnp.float32),
        grid_spec=pltpu.PrefetchScalarGridSpec(
            num_scalar_prefetch=0,
            grid=(1,),
            in_specs=in_specs,
            out_specs=pl.BlockSpec((n_pad, nn_cp), lambda i: (0, 0)),
        ),
        compiler_params=pltpu.CompilerParams(
            dimension_semantics=("arbitrary",),
            vmem_limit_bytes=vmem_limit,
        ),
        cost_estimate=pl.CostEstimate(
            flops=int(flops), transcendentals=0, bytes_accessed=int(bytes_accessed)),
    )(*args)


# ---------------------------------------------------------------------------
# Tiling / path selection
# ---------------------------------------------------------------------------
def _choose_tiles(n_total):
    if n_total <= 1024:
        n_pad = _round_up(n_total, _LANE)            # lane-dense A tiles even when tiny
        tk = n_pad
        tm = n_pad if n_pad <= _LANE else n_pad // 2  # >=2 row tiles when possible (v7x)
    else:
        tk = 512                                      # A tile (tm, 512) bf16
        n_pad = _round_up(n_total, 1024)
        tm = min(1024, n_pad // 2)                    # keep n_m >= 2 for v7x's 2 TCs
    return n_pad, tm, tk


def _fused_small_fits(n_pad, fin_p, hid_p, nn_cp, num_layers, vmem_limit):
    weight_bytes = ((fin_p * hid_p + max(num_layers - 1, 0) * hid_p * hid_p
                     + hid_p * nn_cp) * 2 + (num_layers * hid_p + nn_cp) * 4)
    io_bytes = n_pad * n_pad * 2 + n_pad * fin_p * 2 + n_pad * nn_cp * 4
    live_bytes = 3 * n_pad * max(fin_p, hid_p) * 4
    return n_pad <= 2048 and 2 * (weight_bytes + io_bytes) + live_bytes < vmem_limit


# ---------------------------------------------------------------------------
# Glue: graph normalization, parameter init, forward
# ---------------------------------------------------------------------------
def build_norm_adj(edge_index, num_total_nodes):
    """Dense D^-1/2 (A + I) D^-1/2 with A[dst, src] = 1 (PyG GCNConv norm).

    Matches PyG add_remaining_self_loops: self-loops only added where missing.
    TODO(synk): dense (N, N) adjacency is the scalability limit for large
    graphs; a sparse/segment formulation would be needed there.
    """
    src = edge_index[0].astype(jnp.int32)
    dst = edge_index[1].astype(jnp.int32)
    a = jnp.zeros((num_total_nodes, num_total_nodes), jnp.float32)
    a = a.at[dst, src].add(1.0)
    diag = jnp.diagonal(a)
    a = a + jnp.diag(jnp.where(diag > 0.0, 0.0, 1.0))
    deg = a.sum(axis=1)
    d_inv_sqrt = jnp.where(deg > 0, jax.lax.rsqrt(deg), 0.0)
    return d_inv_sqrt[:, None] * a * d_inv_sqrt[None, :]


def init_params(key, node_classes, embedding_dim, hidden_dim, num_layers):
    params = {"emb": [], "conv_w": [], "conv_b": [], "head_w": [], "head_b": []}
    keys = jax.random.split(key, 3 * len(node_classes) + 2 * num_layers)
    k = 0
    for c in node_classes:                                   # nn.Embedding ~ N(0,1)
        params["emb"].append(
            jax.random.normal(keys[k], (c + 1, embedding_dim), jnp.float32))
        k += 1
    dims = [embedding_dim] + [hidden_dim] * num_layers       # GCNConv: glorot-ish, zero bias
    for li in range(num_layers):
        fin, fout = dims[li], dims[li + 1]
        scale = (6.0 / (fin + fout)) ** 0.5
        params["conv_w"].append(
            jax.random.uniform(keys[k], (fin, fout), jnp.float32, -scale, scale))
        k += 1
        params["conv_b"].append(jnp.zeros((fout,), jnp.float32))
    for c in node_classes:                                    # heads: nn.Linear(hidden, c)
        bound = 1.0 / (hidden_dim ** 0.5)
        params["head_w"].append(
            jax.random.uniform(keys[k], (hidden_dim, c), jnp.float32, -bound, bound))
        k += 1
        params["head_b"].append(
            jax.random.uniform(keys[k], (c,), jnp.float32, -bound, bound))
        k += 1
    return params


def gcn_forward(params, x, edge_index, node_classes, batch_size,
                num_layers, embedding_dim, hidden_dim, force_tiled=False):
    num_nodes = len(node_classes)
    n_total = batch_size * num_nodes

    # ---- per-node embedding lookup (index gather kept in plain JAX glue) ----
    xi = x.reshape(batch_size, num_nodes).astype(jnp.int32)
    embs = []
    for i, table in enumerate(params["emb"]):
        obs = jnp.clip(xi[:, i], 0, node_classes[i])
        embs.append(jnp.take(table, obs, axis=0))             # (batch, emb_dim)
    h = jnp.stack(embs, axis=1).reshape(n_total, embedding_dim)

    # ---- normalized dense adjacency, built once, streamed bf16 by all layers ----
    a_hat = build_norm_adj(edge_index, n_total)

    # ---- padding / tiling (rows + features to lane-dense 128 multiples) ----
    n_pad, tm, tk = _choose_tiles(n_total)
    a_p = _pad2d(a_hat, n_pad, n_pad).astype(jnp.bfloat16)    # zero-padded: see kernel NOTE
    fin_p = _round_up(embedding_dim, _LANE)
    x_p = _pad2d(h, n_pad, fin_p).astype(jnp.bfloat16)
    hid_p = _round_up(hidden_dim, _LANE)

    dims_p = [fin_p] + [hid_p] * num_layers
    conv_w_p, conv_b_p = [], []
    for li in range(num_layers):
        w, b = params["conv_w"][li], params["conv_b"][li]
        conv_w_p.append(_pad2d(w, dims_p[li], dims_p[li + 1]).astype(jnp.bfloat16))
        conv_b_p.append(jnp.pad(b, (0, dims_p[li + 1] - b.shape[0]))
                        .reshape(1, -1).astype(jnp.float32))

    # ---- all-heads weight: columns [i*c_pad, i*c_pad+c_i) hold head i ----
    # Row r = b*num_nodes + i keeps only its own column block afterwards.
    # TODO(synk): dense all-heads output width scales with num_nodes; for very
    # many nodes switch to a block-diagonal or batched-einsum formulation.
    c_pad = _round_up(max(node_classes), _LANE)
    nn_cp = num_nodes * c_pad
    hw = jnp.zeros((hid_p, nn_cp), jnp.float32)
    hb = jnp.zeros((1, nn_cp), jnp.float32)
    for i, c in enumerate(node_classes):
        hw = hw.at[:hidden_dim, i * c_pad:i * c_pad + c].set(params["head_w"][i])
        hb = hb.at[0, i * c_pad:i * c_pad + c].set(params["head_b"][i])
    hw = hw.astype(jnp.bfloat16)

    vmem_limit = _vmem_limit_bytes()

    if (not force_tiled) and _fused_small_fits(n_pad, fin_p, hid_p, nn_cp,
                                               num_layers, vmem_limit):
        # Single pallas_call: all conv layers + heads, everything VMEM-resident.
        logits_all = gcn_fused_small(a_p, x_p, conv_w_p, conv_b_p, hw, hb,
                                     vmem_limit=vmem_limit)
    else:
        # General tiled path: one fused pallas_call per layer (X@W computed
        # in-kernel, A_hat streamed once per layer); heads folded into the last
        # layer's finalize -> 2 calls for the default 2-layer GCN.
        h_p = x_p
        for li in range(num_layers):
            last = li == num_layers - 1
            h_p = gcn_layer(a_p, h_p, conv_w_p[li], conv_b_p[li],
                            relu=not last, tm=tm, tk=tk, vmem_limit=vmem_limit,
                            head_w=hw if last else None,
                            head_b=hb if last else None,
                            out_dtype=jnp.float32 if last else jnp.bfloat16)
        logits_all = h_p                                       # (n_pad, nn_cp) f32

    logits_all = logits_all[:n_total].reshape(batch_size, num_nodes, nn_cp)
    return [logits_all[:, i, i * c_pad:i * c_pad + c]
            for i, c in enumerate(node_classes)]


# ---------------------------------------------------------------------------
# Pure-JAX f32 reference (correctness check of the bf16 kernel path)
# ---------------------------------------------------------------------------
def gcn_reference(params, x, edge_index, node_classes, batch_size,
                  num_layers, embedding_dim):
    num_nodes = len(node_classes)
    n_total = batch_size * num_nodes
    xi = x.reshape(batch_size, num_nodes).astype(jnp.int32)
    embs = [jnp.take(params["emb"][i], jnp.clip(xi[:, i], 0, node_classes[i]), axis=0)
            for i in range(num_nodes)]
    h = jnp.stack(embs, axis=1).reshape(n_total, embedding_dim)
    a_hat = build_norm_adj(edge_index, n_total)
    for li in range(num_layers):
        h = a_hat @ (h @ params["conv_w"][li]) + params["conv_b"][li]
        if li < num_layers - 1:
            h = jnp.maximum(h, 0.0)
    h = h.reshape(batch_size, num_nodes, -1)
    return [h[:, i, :] @ params["head_w"][i] + params["head_b"][i]
            for i in range(num_nodes)]


# ---------------------------------------------------------------------------
if __name__ == "__main__":
    node_classes = [3, 5, 4, 6]          # -> num_nodes = 4
    embedding_dim = 16
    hidden_dim = 32
    num_layers = 2
    batch_size = 2
    num_nodes = len(node_classes)
    n_total = batch_size * num_nodes

    key = jax.random.PRNGKey(0)
    k_param, k_x = jax.random.split(key)
    params = init_params(k_param, node_classes, embedding_dim, hidden_dim, num_layers)

    # x: (batch*num_nodes, 1) integer observations
    max_c = max(node_classes)
    x = jax.random.randint(k_x, (n_total, 1), 0, max_c + 1, dtype=jnp.int32)

    # bidirectional ring per graph, offset per batch element (PyG-style batching)
    ring = [(0, 1), (1, 2), (2, 3), (3, 0)]
    src, dst = [], []
    for g in range(batch_size):
        off = g * num_nodes
        for a, b in ring:
            src += [a + off, b + off]
            dst += [b + off, a + off]
    edge_index = jnp.array([src, dst], dtype=jnp.int32)   # (2, E)

    ref = gcn_reference(params, x, edge_index, node_classes, batch_size,
                        num_layers, embedding_dim)

    # 1) default path: fully-fused single pallas_call (small graph)
    logits = gcn_forward(params, x, edge_index, node_classes, batch_size,
                         num_layers, embedding_dim, hidden_dim)
    logits = [jax.block_until_ready(l) for l in logits]
    for i, (l, c) in enumerate(zip(logits, node_classes)):
        assert l.shape == (batch_size, c), (i, l.shape)
    for i, (l, r) in enumerate(zip(logits, ref)):
        err = float(jnp.max(jnp.abs(l - r)))
        assert err < 1e-1, ("fused", i, err)

    # 2) general tiled path (exercised on the same inputs via force_tiled)
    logits_t = gcn_forward(params, x, edge_index, node_classes, batch_size,
                           num_layers, embedding_dim, hidden_dim, force_tiled=True)
    logits_t = [jax.block_until_ready(l) for l in logits_t]
    for i, (l, r) in enumerate(zip(logits_t, ref)):
        err = float(jnp.max(jnp.abs(l - r)))
        assert err < 1e-1, ("tiled", i, err)

    print("KERNEL_OK")
</pallas_src>

<mosaic_0001>
module attributes {stable_mosaic.version = 11 : i64} {
  func.func @_gcn_fused_small_kernel(%arg0: i32, %arg1: memref<128x128xbf16, #tpu.memory_space<vmem>>, %arg2: memref<128x128xbf16, #tpu.memory_space<vmem>>, %arg3: memref<128x128xbf16, #tpu.memory_space<vmem>>, %arg4: memref<1x128xf32, #tpu.memory_space<vmem>>, %arg5: memref<128x128xbf16, #tpu.memory_space<vmem>>, %arg6: memref<1x128xf32, #tpu.memory_space<vmem>>, %arg7: memref<128x512xbf16, #tpu.memory_space<vmem>>, %arg8: memref<1x512xf32, #tpu.memory_space<vmem>>, %arg9: memref<128x512xf32, #tpu.memory_space<vmem>>) attributes {dimension_semantics = [#tpu.dimension_semantics<arbitrary>], iteration_bounds = array<i64: 1>, scalar_prefetch = 0 : i64, scratch_operands = 0 : i64, tpu.core_type = #tpu.core_type<tc>, window_params = [{pipeline_mode = #tpu.pipeline_mode<synchronous>, transform_indices = @transform_0, window_bounds = array<i64: 128, 128>}, {pipeline_mode = #tpu.pipeline_mode<synchronous>, transform_indices = @transform_1, window_bounds = array<i64: 128, 128>}, {pipeline_mode = #tpu.pipeline_mode<synchronous>, transform_indices = @transform_2, window_bounds = array<i64: 128, 128>}, {pipeline_mode = #tpu.pipeline_mode<synchronous>, transform_indices = @transform_3, window_bounds = array<i64: 1, 128>}, {pipeline_mode = #tpu.pipeline_mode<synchronous>, transform_indices = @transform_4, window_bounds = array<i64: 128, 128>}, {pipeline_mode = #tpu.pipeline_mode<synchronous>, transform_indices = @transform_5, window_bounds = array<i64: 1, 128>}, {pipeline_mode = #tpu.pipeline_mode<synchronous>, transform_indices = @transform_6, window_bounds = array<i64: 128, 512>}, {pipeline_mode = #tpu.pipeline_mode<synchronous>, transform_indices = @transform_7, window_bounds = array<i64: 1, 512>}, {pipeline_mode = #tpu.pipeline_mode<synchronous>, transform_indices = @transform_8, window_bounds = array<i64: 128, 512>}]} {
    %c0 = arith.constant 0 : index
    %c0_0 = arith.constant 0 : index
    %0 = vector.load %arg1[%c0, %c0_0] : memref<128x128xbf16, #tpu.memory_space<vmem>>, vector<128x128xbf16>
    %c0_1 = arith.constant 0 : index
    %c0_2 = arith.constant 0 : index
    %1 = vector.load %arg2[%c0_1, %c0_2] : memref<128x128xbf16, #tpu.memory_space<vmem>>, vector<128x128xbf16>
    %c0_3 = arith.constant 0 : index
    %c0_4 = arith.constant 0 : index
    %2 = vector.load %arg3[%c0_3, %c0_4] : memref<128x128xbf16, #tpu.memory_space<vmem>>, vector<128x128xbf16>
    %c0_5 = arith.constant 0 : index
    %c0_6 = arith.constant 0 : index
    %3 = vector.load %arg4[%c0_5, %c0_6] : memref<1x128xf32, #tpu.memory_space<vmem>>, vector<1x128xf32>
    %cst = arith.constant dense<0.000000e+00> : vector<128x128xf32>
    %4 = tpu.matmul %1, %2, %cst {dimension_numbers = #tpu.dot_dimension_numbers<[1], [0], [0], [1], [0, 0, 1, 1], [], []>} : vector<128x128xbf16>, vector<128x128xbf16>, vector<128x128xf32> -> vector<128x128xf32>
    %5 = arith.truncf %4 : vector<128x128xf32> to vector<128x128xbf16>
    %cst_7 = arith.constant dense<0.000000e+00> : vector<128x128xf32>
    %6 = tpu.matmul %0, %5, %cst_7 {dimension_numbers = #tpu.dot_dimension_numbers<[1], [0], [0], [1], [0, 0, 1, 1], [], []>} : vector<128x128xbf16>, vector<128x128xbf16>, vector<128x128xf32> -> vector<128x128xf32>
    %7 = vector.broadcast %3 : vector<1x128xf32> to vector<128x128xf32>
    %8 = arith.addf %6, %7 : vector<128x128xf32>
    %cst_8 = arith.constant 0.000000e+00 : f32
    %9 = vector.broadcast %cst_8 : f32 to vector<128x128xf32>
    %10 = arith.maximumf %8, %9 : vector<128x128xf32>
    %11 = arith.truncf %10 : vector<128x128xf32> to vector<128x128xbf16>
    %c0_9 = arith.constant 0 : index
    %c0_10 = arith.constant 0 : index
    %12 = vector.load %arg5[%c0_9, %c0_10] : memref<128x128xbf16, #tpu.memory_space<vmem>>, vector<128x128xbf16>
    %c0_11 = arith.constant 0 : index
    %c0_12 = arith.constant 0 : index
    %13 = vector.load %arg6[%c0_11, %c0_12] : memref<1x128xf32, #tpu.memory_space<vmem>>, vector<1x128xf32>
    %cst_13 = arith.constant dense<0.000000e+00> : vector<128x128xf32>
    %14 = tpu.matmul %11, %12, %cst_13 {dimension_numbers = #tpu.dot_dimension_numbers<[1], [0], [0], [1], [0, 0, 1, 1], [], []>} : vector<128x128xbf16>, vector<128x128xbf16>, vector<128x128xf32> -> vector<128x128xf32>
    %15 = arith.truncf %14 : vector<128x128xf32> to vector<128x128xbf16>
    %cst_14 = arith.constant dense<0.000000e+00> : vector<128x128xf32>
    %16 = tpu.matmul %0, %15, %cst_14 {dimension_numbers = #tpu.dot_dimension_numbers<[1], [0], [0], [1], [0, 0, 1, 1], [], []>} : vector<128x128xbf16>, vector<128x128xbf16>, vector<128x128xf32> -> vector<128x128xf32>
    %17 = vector.broadcast %13 : vector<1x128xf32> to vector<128x128xf32>
    %18 = arith.addf %16, %17 : vector<128x128xf32>
    %19 = arith.truncf %18 : vector<128x128xf32> to vector<128x128xbf16>
    %c0_15 = arith.constant 0 : index
    %c0_16 = arith.constant 0 : index
    %20 = vector.load %arg7[%c0_15, %c0_16] : memref<128x512xbf16, #tpu.memory_space<vmem>>, vector<128x512xbf16>
    %cst_17 = arith.constant dense<0.000000e+00> : vector<128x512xf32>
    %21 = tpu.matmul %19, %20, %cst_17 {dimension_numbers = #tpu.dot_dimension_numbers<[1], [0], [0], [1], [0, 0, 1, 1], [], []>} : vector<128x128xbf16>, vector<128x512xbf16>, vector<128x512xf32> -> vector<128x512xf32>
    %c0_18 = arith.constant 0 : index
    %c0_19 = arith.constant 0 : index
    %22 = vector.load %arg8[%c0_18, %c0_19] : memref<1x512xf32, #tpu.memory_space<vmem>>, vector<1x512xf32>
    %23 = vector.broadcast %22 : vector<1x512xf32> to vector<128x512xf32>
    %24 = arith.addf %21, %23 : vector<128x512xf32>
    %c0_20 = arith.constant 0 : index
    %c0_21 = arith.constant 0 : index
    %25 = vector.load %arg9[%c0_20, %c0_21] : memref<128x512xf32, #tpu.memory_space<vmem>>, vector<128x512xf32>
    tpu.vector_store %arg9[%c0_20, %c0_21], %24 {strides = array<i32>} : memref<128x512xf32, #tpu.memory_space<vmem>>, vector<128x512xf32>,
    return
  }
  func.func @transform_0(%arg0: i32) -> (i32, i32) {
    %c0_i32 = arith.constant 0 : i32
    %c0_i32_0 = arith.constant 0 : i32
    %c0_i32_1 = arith.constant 0 : i32
    return %c0_i32, %c0_i32_0 : i32, i32
  }
  func.func @transform_1(%arg0: i32) -> (i32, i32) {
    %c0_i32 = arith.constant 0 : i32
    %c0_i32_0 = arith.constant 0 : i32
    %c0_i32_1 = arith.constant 0 : i32
    return %c0_i32, %c0_i32_0 : i32, i32
  }
  func.func @transform_2(%arg0: i32) -> (i32, i32) {
    %c0_i32 = arith.constant 0 : i32
    %c0_i32_0 = arith.constant 0 : i32
    %c0_i32_1 = arith.constant 0 : i32
    return %c0_i32, %c0_i32_0 : i32, i32
  }
  func.func @transform_3(%arg0: i32) -> (i32, i32) {
    %c0_i32 = arith.constant 0 : i32
    %c0_i32_0 = arith.constant 0 : i32
    %c0_i32_1 = arith.constant 0 : i32
    return %c0_i32, %c0_i32_0 : i32, i32
  }
  func.func @transform_4(%arg0: i32) -> (i32, i32) {
    %c0_i32 = arith.constant 0 : i32
    %c0_i32_0 = arith.constant 0 : i32
    %c0_i32_1 = arith.constant 0 : i32
    return %c0_i32, %c0_i32_0 : i32, i32
  }
  func.func @transform_5(%arg0: i32) -> (i32, i32) {
    %c0_i32 = arith.constant 0 : i32
    %c0_i32_0 = arith.constant 0 : i32
    %c0_i32_1 = arith.constant 0 : i32
    return %c0_i32, %c0_i32_0 : i32, i32
  }
  func.func @transform_6(%arg0: i32) -> (i32, i32) {
    %c0_i32 = arith.constant 0 : i32
    %c0_i32_0 = arith.constant 0 : i32
    %c0_i32_1 = arith.constant 0 : i32
    return %c0_i32, %c0_i32_0 : i32, i32
  }
  func.func @transform_7(%arg0: i32) -> (i32, i32) {
    %c0_i32 = arith.constant 0 : i32
    %c0_i32_0 = arith.constant 0 : i32
    %c0_i32_1 = arith.constant 0 : i32
    return %c0_i32, %c0_i32_0 : i32, i32
  }
  func.func @transform_8(%arg0: i32) -> (i32, i32) {
    %c0_i32 = arith.constant 0 : i32
    %c0_i32_0 = arith.constant 0 : i32
    %c0_i32_1 = arith.constant 0 : i32
    return %c0_i32, %c0_i32_0 : i32, i32
  }
}

</mosaic_0001>

<llo_original>
// kernel: tpu_custom_call.1
$region0: #{tpu_custom_call.1}
  #allocation0 [shape = 'u32[]', space=smem, size = 0x4, offset = 0x4, fixed_abs, tag = 'smem constant byte address 0x4 - core index']
  #allocation1 [shape = 'u32[144,128]{1,0:T(1,128)}', space=vmem, size = 0x12000, scoped, tag = 'internal scratch']
  %s0 = inlined_call_operand.hbm [shape: bf16[128,128], index: 0, kind: input, shape index: {}]
  %s1 = inlined_call_operand.hbm [shape: bf16[128,128], index: 1, kind: input, shape index: {}]
  %s2 = inlined_call_operand.hbm [shape: bf16[128,128], index: 2, kind: input, shape index: {}]
  %s3 = inlined_call_operand.vmem [shape: f32[1,128], index: 3, kind: input, shape index: {}]
  %s4 = inlined_call_operand.hbm [shape: bf16[128,128], index: 4, kind: input, shape index: {}]
  %s5 = inlined_call_operand.vmem [shape: f32[1,128], index: 5, kind: input, shape index: {}]
  %s6 = inlined_call_operand.hbm [shape: bf16[128,512], index: 6, kind: input, shape index: {}]
  %s7 = inlined_call_operand.vmem [shape: f32[1,512], index: 7, kind: input, shape index: {}]
  %s8 = inlined_call_operand.hbm [shape: f32[128,512], index: 8, kind: output, shape index: {}]
  %s9 = sld [smem:[#allocation0]]
  $region62: #{tpu_custom_call.1} parent=0
    _
  %s11 = ssub.s32 1, %s9
  %s12 = scalar_select 0, %s11, %s9
  $region1: #{tpu_custom_call.1} parent=0
    #allocation2 [shape = 'u8[32768]{0}', space=vmem, size = 0x8000, scoped, tag = 'input window, operand 0, single buffered']
    #allocation3 [shape = 's32[1]{0}', space=sflag, size = 0x4, scoped, tag = 'scoped memory for tpu_custom_call.1']
    #allocation4 [shape = 's32[1]{0}', space=sflag, size = 0x4, scoped, tag = 'scoped memory for tpu_custom_call.1']
    #allocation5 [shape = 'u8[32768]{0}', space=vmem, size = 0x8000, scoped, tag = 'input window, operand 1, single buffered']
    #allocation6 [shape = 's32[1]{0}', space=sflag, size = 0x4, scoped, tag = 'scoped memory for tpu_custom_call.1']
    #allocation7 [shape = 'u8[32768]{0}', space=vmem, size = 0x8000, scoped, tag = 'input window, operand 2, single buffered']
    #allocation8 [shape = 'u8[32768]{0}', space=vmem, size = 0x8000, scoped, tag = 'input window, operand 4, single buffered']
    #allocation9 [shape = 's32[1]{0}', space=sflag, size = 0x4, scoped, tag = 'scoped memory for tpu_custom_call.1']
    #allocation10 [shape = 'u8[131072]{0}', space=vmem, size = 0x20000, scoped, tag = 'input window, operand 6, single buffered']
    #allocation11 [shape = 'u8[262144]{0}', space=vmem, size = 0x40000, scoped, tag = 'output window, operand 0, single buffered']
    %13 = vsyncpa [#allocation3], 0
    %14 = vsyncpa [#allocation6], 0
    %15 = vsyncpa [#allocation9], 0
    %16 = vsyncpa [#allocation4], 0
    // Predicated region
    $region2: #{tpu_custom_call.1} parent=1 // pred_check
      _
    $region3: #{tpu_custom_call.1} parent=1 // pred_check_branch
      %18 = sbr.rel (0) target = $region5
    $region4: #{tpu_custom_call.1} parent=1 // pred_region
      %s20 = ssub.s32 1024, 1024
      %21 = vsyncadd [#allocation3], %s20
      %s22 = sshll.u32 [#allocation2], 4
      %s23 = int_to_ptr.vmem [resolvable:$true] %s22
      %28 = dma.hbm_to_vmem [thread:$0]  %s0, 1024, %s23, [#allocation3], 64, 64, 4
    $region5: #{tpu_custom_call.1} parent=1 // pred_fallthru
      _
    // Predicated region
    $region6: #{tpu_custom_call.1} parent=1 // pred_check
      _
    $region7: #{tpu_custom_call.1} parent=1 // pred_check_branch
      %30 = sbr.rel (0) target = $region9
    $region8: #{tpu_custom_call.1} parent=1 // pred_region
      %s32 = ssub.s32 1024, 1024
      %33 = vsyncadd [#allocation6], %s32
      %s34 = sshll.u32 [#allocation5], 4
      %s35 = int_to_ptr.vmem [resolvable:$true] %s34
      %40 = dma.hbm_to_vmem [thread:$0]  %s1, 1024, %s35, [#allocation6], 64, 64, 4
    $region9: #{tpu_custom_call.1} parent=1 // pred_fallthru
      _
    // Predicated region
    $region10: #{tpu_custom_call.1} parent=1 // pred_check
      _
    $region11: #{tpu_custom_call.1} parent=1 // pred_check_branch
      %42 = sbr.rel (0) target = $region13
    $region12: #{tpu_custom_call.1} parent=1 // pred_region
      %s44 = ssub.s32 1024, 1024
      %45 = vsyncadd [#allocation6], %s44
      %s46 = sshll.u32 [#allocation7], 4
      %s47 = int_to_ptr.vmem [resolvable:$true] %s46
      %52 = dma.hbm_to_vmem [thread:$0]  %s2, 1024, %s47, [#allocation6], 64, 64, 4
    $region13: #{tpu_custom_call.1} parent=1 // pred_fallthru
      _
    // Predicated region
    $region14: #{tpu_custom_call.1} parent=1 // pred_check
      _
    $region15: #{tpu_custom_call.1} parent=1 // pred_check_branch
      %54 = sbr.rel (0) target = $region17
    $region16: #{tpu_custom_call.1} parent=1 // pred_region
      _
    $region17: #{tpu_custom_call.1} parent=1 // pred_fallthru
      _
    // Predicated region
    $region18: #{tpu_custom_call.1} parent=1 // pred_check
      _
    $region19: #{tpu_custom_call.1} parent=1 // pred_check_branch
      %56 = sbr.rel (0) target = $region21
    $region20: #{tpu_custom_call.1} parent=1 // pred_region
      %s58 = ssub.s32 1024, 1024
      %59 = vsyncadd [#allocation9], %s58
      %s60 = sshll.u32 [#allocation8], 4
      %s61 = int_to_ptr.vmem [resolvable:$true] %s60
      %66 = dma.hbm_to_vmem [thread:$0]  %s4, 1024, %s61, [#allocation9], 64, 64, 4
    $region21: #{tpu_custom_call.1} parent=1 // pred_fallthru
      _
    // Predicated region
    $region22: #{tpu_custom_call.1} parent=1 // pred_check
      _
    $region23: #{tpu_custom_call.1} parent=1 // pred_check_branch
      %68 = sbr.rel (0) target = $region25
    $region24: #{tpu_custom_call.1} parent=1 // pred_region
      _
    $region25: #{tpu_custom_call.1} parent=1 // pred_fallthru
      _
    // Predicated region
    $region26: #{tpu_custom_call.1} parent=1 // pred_check
      _
    $region27: #{tpu_custom_call.1} parent=1 // pred_check_branch
      %70 = sbr.rel (0) target = $region29
    $region28: #{tpu_custom_call.1} parent=1 // pred_region
      %s72 = ssub.s32 4096, 4096
      %73 = vsyncadd [#allocation9], %s72
      %s74 = sshll.u32 [#allocation10], 4
      %s75 = int_to_ptr.vmem [resolvable:$true] %s74
      %80 = dma.hbm_to_vmem [thread:$0]  %s6, 4096, %s75, [#allocation9], 256, 256, 16
    $region29: #{tpu_custom_call.1} parent=1 // pred_fallthru
      _
    // Predicated region
    $region30: #{tpu_custom_call.1} parent=1 // pred_check
      _
    $region31: #{tpu_custom_call.1} parent=1 // pred_check_branch
      %82 = sbr.rel (0) target = $region33
    $region32: #{tpu_custom_call.1} parent=1 // pred_region
      _
    $region33: #{tpu_custom_call.1} parent=1 // pred_fallthru
      _
    // Predicated region
    $region34: #{tpu_custom_call.1} parent=1 // pred_check
      _
    $region35: #{tpu_custom_call.1} parent=1 // pred_check_branch
      %84 = sbr.rel (0) target = $region37
    $region36: #{tpu_custom_call.1} parent=1 // pred_region
      %85 = dma.done [#allocation3], 1024
    $region37: #{tpu_custom_call.1} parent=1 // pred_fallthru
      _
    // Predicated region
    $region38: #{tpu_custom_call.1} parent=1 // pred_check
      _
    $region39: #{tpu_custom_call.1} parent=1 // pred_check_branch
      %87 = sbr.rel (0) target = $region41
    $region40: #{tpu_custom_call.1} parent=1 // pred_region
      %88 = dma.done [#allocation6], 1024
    $region41: #{tpu_custom_call.1} parent=1 // pred_fallthru
      _
    // Predicated region
    $region42: #{tpu_custom_call.1} parent=1 // pred_check
      _
    $region43: #{tpu_custom_call.1} parent=1 // pred_check_branch
      %90 = sbr.rel (0) target = $region45
    $region44: #{tpu_custom_call.1} parent=1 // pred_region
      %91 = dma.done [#allocation6], 1024
    $region45: #{tpu_custom_call.1} parent=1 // pred_fallthru
      _
    // Predicated region
    $region46: #{tpu_custom_call.1} parent=1 // pred_check
      _
    $region47: #{tpu_custom_call.1} parent=1 // pred_check_branch
      %93 = sbr.rel (0) target = $region49
    $region48: #{tpu_custom_call.1} parent=1 // pred_region
      %94 = dma.done [#allocation9], 1024
    $region49: #{tpu_custom_call.1} parent=1 // pred_fallthru
      _
    // Predicated region
    $region50: #{tpu_custom_call.1} parent=1 // pred_check
      _
    $region51: #{tpu_custom_call.1} parent=1 // pred_check_branch
      %96 = sbr.rel (0) target = $region53
    $region52: #{tpu_custom_call.1} parent=1 // pred_region
      %97 = dma.done [#allocation9], 4096
    $region53: #{tpu_custom_call.1} parent=1 // pred_fallthru
      _
    %v99 = vld [vmem:[#allocation2] sm:$0xf]
    %v100 = vld [vmem:[#allocation2 + $0x4] sm:$0xf]
    %v101 = vld [vmem:[#allocation2 + $0x8] sm:$0xf]
    %v102 = vld [vmem:[#allocation2 + $0xc] sm:$0xf]
    %v103 = vld [vmem:[#allocation2 + $0x10] sm:$0xf]
    %v104 = vld [vmem:[#allocation2 + $0x14] sm:$0xf]
    %v105 = vld [vmem:[#allocation2 + $0x18] sm:$0xf]
    %v106 = vld [vmem:[#allocation2 + $0x1c] sm:$0xf]
    %v107 = vld [vmem:[#allocation2 + $0x20] sm:$0xf]
    %v108 = vld [vmem:[#allocation2 + $0x24] sm:$0xf]
    %v109 = vld [vmem:[#allocation2 + $0x28] sm:$0xf]
    %v110 = vld [vmem:[#allocation2 + $0x2c] sm:$0xf]
    %v111 = vld [vmem:[#allocation2 + $0x30] sm:$0xf]
    %v112 = vld [vmem:[#allocation2 + $0x34] sm:$0xf]
    %v113 = vld [vmem:[#allocation2 + $0x38] sm:$0xf]
    %v114 = vld [vmem:[#allocation2 + $0x3c] sm:$0xf]
    %v115 = vld [vmem:[#allocation5] sm:$0xf]
    %v116 = vld [vmem:[#allocation5 + $0x4] sm:$0xf]
    %v117 = vld [vmem:[#allocation5 + $0x8] sm:$0xf]
    %v118 = vld [vmem:[#allocation5 + $0xc] sm:$0xf]
    %v119 = vld [vmem:[#allocation5 + $0x10] sm:$0xf]
    %v120 = vld [vmem:[#allocation5 + $0x14] sm:$0xf]
    %v121 = vld [vmem:[#allocation5 + $0x18] sm:$0xf]
    %v122 = vld [vmem:[#allocation5 + $0x1c] sm:$0xf]
    %v123 = vld [vmem:[#allocation5 + $0x20] sm:$0xf]
    %v124 = vld [vmem:[#allocation5 + $0x24] sm:$0xf]
    %v125 = vld [vmem:[#allocation5 + $0x28] sm:$0xf]
    %v126 = vld [vmem:[#allocation5 + $0x2c] sm:$0xf]
    %v127 = vld [vmem:[#allocation5 + $0x30] sm:$0xf]
    %v128 = vld [vmem:[#allocation5 + $0x34] sm:$0xf]
    %v129 = vld [vmem:[#allocation5 + $0x38] sm:$0xf]
    %v130 = vld [vmem:[#allocation5 + $0x3c] sm:$0xf]
    %v131 = vld [vmem:[#allocation7] sm:$0xf]
    %v132 = vld [vmem:[#allocation7 + $0x4] sm:$0xf]
    %v133 = vld [vmem:[#allocation7 + $0x8] sm:$0xf]
    %v134 = vld [vmem:[#allocation7 + $0xc] sm:$0xf]
    %v135 = vld [vmem:[#allocation7 + $0x10] sm:$0xf]
    %v136 = vld [vmem:[#allocation7 + $0x14] sm:$0xf]
    %v137 = vld [vmem:[#allocation7 + $0x18] sm:$0xf]
    %v138 = vld [vmem:[#allocation7 + $0x1c] sm:$0xf]
    %v139 = vld [vmem:[#allocation7 + $0x20] sm:$0xf]
    %v140 = vld [vmem:[#allocation7 + $0x24] sm:$0xf]
    %v141 = vld [vmem:[#allocation7 + $0x28] sm:$0xf]
    %v142 = vld [vmem:[#allocation7 + $0x2c] sm:$0xf]
    %v143 = vld [vmem:[#allocation7 + $0x30] sm:$0xf]
    %v144 = vld [vmem:[#allocation7 + $0x34] sm:$0xf]
    %v145 = vld [vmem:[#allocation7 + $0x38] sm:$0xf]
    %v146 = vld [vmem:[#allocation7 + $0x3c] sm:$0xf]
    %v147 = vld [vmem:[%s3] sm:$0x1]
    %v164 = vunpack.c.l.b16 %v115
    %v165 = vunpack.c.l.b16 %v116
    %v166 = vunpack.c.l.b16 %v117
    %v167 = vunpack.c.l.b16 %v118
    %v168 = vunpack.c.l.b16 %v119
    %v169 = vunpack.c.l.b16 %v120
    %v170 = vunpack.c.l.b16 %v121
    %v171 = vunpack.c.l.b16 %v122
    %v172 = vunpack.c.l.b16 %v123
    %v173 = vunpack.c.l.b16 %v124
    %v174 = vunpack.c.l.b16 %v125
    %v175 = vunpack.c.l.b16 %v126
    %v176 = vunpack.c.l.b16 %v127
    %v177 = vunpack.c.l.b16 %v128
    %v178 = vunpack.c.l.b16 %v129
    %v179 = vunpack.c.l.b16 %v130
    %v180 = vpack.c.b16 %v165, %v164
    %v181 = vpack.c.b16 %v167, %v166
    %v182 = vpack.c.b16 %v169, %v168
    %v183 = vpack.c.b16 %v171, %v170
    %v184 = vpack.c.b16 %v173, %v172
    %v185 = vpack.c.b16 %v175, %v174
    %v186 = vpack.c.b16 %v177, %v176
    %v187 = vpack.c.b16 %v179, %v178
    %v212 = vunpack.c.l.b16 %v131
    %v213 = vunpack.c.l.b16 %v132
    %v214 = vunpack.c.l.b16 %v133
    %v215 = vunpack.c.l.b16 %v134
    %v216 = vunpack.c.l.b16 %v135
    %v217 = vunpack.c.l.b16 %v136
    %v218 = vunpack.c.l.b16 %v137
    %v219 = vunpack.c.l.b16 %v138
    %v220 = vunpack.c.l.b16 %v139
    %v221 = vunpack.c.l.b16 %v140
    %v222 = vunpack.c.l.b16 %v141
    %v223 = vunpack.c.l.b16 %v142
    %v224 = vunpack.c.l.b16 %v143
    %v225 = vunpack.c.l.b16 %v144
    %v226 = vunpack.c.l.b16 %v145
    %v227 = vunpack.c.l.b16 %v146
    %v228 = vpack.c.b16 %v213, %v212
    %v229 = vpack.c.b16 %v215, %v214
    %v230 = vpack.c.b16 %v217, %v216
    %v231 = vpack.c.b16 %v219, %v218
    %v232 = vpack.c.b16 %v221, %v220
    %v233 = vpack.c.b16 %v223, %v222
    %v234 = vpack.c.b16 %v225, %v224
    %v235 = vpack.c.b16 %v227, %v226
    %244 = vmatprep.subr.bf16.mxu0 0
    %245 = vmatpush1.bf16.msra.mxu0 %v235
    %246 = vmatprep.subr.bf16.mxu0 0
    %247 = vmatpush1.bf16.msra.mxu0 %v234
    %248 = vmatprep.subr.bf16.mxu0 0
    %249 = vmatpush1.bf16.msra.mxu0 %v233
    %250 = vmatprep.subr.bf16.mxu0 0
    %251 = vmatpush1.bf16.msra.mxu0 %v232
    %252 = vmatprep.subr.bf16.mxu0 0
    %253 = vmatpush1.bf16.msra.mxu0 %v231
    %254 = vmatprep.subr.bf16.mxu0 0
    %255 = vmatpush1.bf16.msra.mxu0 %v230
    %256 = vmatprep.subr.bf16.mxu0 0
    %257 = vmatpush1.bf16.msra.mxu0 %v229
    %258 = vmatprep.subr.bf16.mxu0 0
    %259 = vmatpush1.bf16.msra.mxu0 %v228
    %260 = vmatprep.subr.bf16.mxu0 0
    %261 = vmatpush2.bf16.msra.mxu0 0
    %262 = vmatprep.subr.bf16.mxu0 0
    %263 = vmatpush2.bf16.msra.mxu0 0
    %264 = vmatprep.subr.bf16.mxu0 0
    %265 = vmatpush2.bf16.msra.mxu0 0
    %266 = vmatprep.subr.bf16.mxu0 0
    %267 = vmatpush2.bf16.msra.mxu0 0
    %268 = vmatprep.subr.bf16.mxu0 0
    %269 = vmatpush2.bf16.msra.mxu0 0
    %270 = vmatprep.subr.bf16.mxu0 0
    %271 = vmatpush2.bf16.msra.mxu0 0
    %272 = vmatprep.subr.bf16.mxu0 0
    %273 = vmatpush2.bf16.msra.mxu0 0
    %274 = vmatprep.subr.bf16.mxu0 0
    %275 = vmatpush2.bf16.msra.mxu0 0
    %276 = vmatprep.mubr.bf16.mxu0 0
    %277 = vmatmul.mubr.bf16.gmra.mxu0 %v180
    %v278 = vpop.f32.mrf.mxu0
    %v279 = vadd.f32 0.0, %v278
    %v280 = vpop.f32.mrf.mxu0
    %v281 = vpop.f32.mrf.mxu0
    %v282 = vadd.f32 0.0, %v281
    %v283 = vpop.f32.mrf.mxu0
    %284 = vmatprep.mubr.bf16.mxu0 0
    %285 = vmatmul.mubr.bf16.gmra.mxu0 %v181
    %v286 = vpop.f32.mrf.mxu0
    %v287 = vadd.f32 0.0, %v286
    %v288 = vpop.f32.mrf.mxu0
    %v289 = vpop.f32.mrf.mxu0
    %v290 = vadd.f32 0.0, %v289
    %v291 = vpop.f32.mrf.mxu0
    %292 = vmatprep.mubr.bf16.mxu0 0
    %293 = vmatmul.mubr.bf16.gmra.mxu0 %v182
    %v294 = vpop.f32.mrf.mxu0
    %v295 = vadd.f32 0.0, %v294
    %v296 = vpop.f32.mrf.mxu0
    %v297 = vpop.f32.mrf.mxu0
    %v298 = vadd.f32 0.0, %v297
    %v299 = vpop.f32.mrf.mxu0
    %300 = vmatprep.mubr.bf16.mxu0 0
    %301 = vmatmul.mubr.bf16.gmra.mxu0 %v183
    %v302 = vpop.f32.mrf.mxu0
    %v303 = vadd.f32 0.0, %v302
    %v304 = vpop.f32.mrf.mxu0
    %v305 = vpop.f32.mrf.mxu0
    %v306 = vadd.f32 0.0, %v305
    %v307 = vpop.f32.mrf.mxu0
    %308 = vmatprep.mubr.bf16.mxu0 0
    %309 = vmatmul.mubr.bf16.gmra.mxu0 %v184
    %v310 = vpop.f32.mrf.mxu0
    %v311 = vadd.f32 0.0, %v310
    %v312 = vpop.f32.mrf.mxu0
    %v313 = vpop.f32.mrf.mxu0
    %v314 = vadd.f32 0.0, %v313
    %v315 = vpop.f32.mrf.mxu0
    %316 = vmatprep.mubr.bf16.mxu0 0
    %317 = vmatmul.mubr.bf16.gmra.mxu0 %v185
    %v318 = vpop.f32.mrf.mxu0
    %v319 = vadd.f32 0.0, %v318
    %v320 = vpop.f32.mrf.mxu0
    %v321 = vpop.f32.mrf.mxu0
    %v322 = vadd.f32 0.0, %v321
    %v323 = vpop.f32.mrf.mxu0
    %324 = vmatprep.mubr.bf16.mxu0 0
    %325 = vmatmul.mubr.bf16.gmra.mxu0 %v186
    %v326 = vpop.f32.mrf.mxu0
    %v327 = vadd.f32 0.0, %v326
    %v328 = vpop.f32.mrf.mxu0
    %v329 = vpop.f32.mrf.mxu0
    %v330 = vadd.f32 0.0, %v329
    %v331 = vpop.f32.mrf.mxu0
    %332 = vmatprep.mubr.bf16.mxu0 0
    %333 = vmatmul.mubr.bf16.gmra.mxu0 %v187
    %v334 = vpop.f32.mrf.mxu0
    %v335 = vadd.f32 0.0, %v334
    %v336 = vpop.f32.mrf.mxu0
    %v337 = vpop.f32.mrf.mxu0
    %v338 = vadd.f32 0.0, %v337
    %v339 = vpop.f32.mrf.mxu0
    %340 = vdwg.mxu0
    %v341 = vpack.c.bf16 %v282, %v279
    %v342 = vpack.c.bf16 %v290, %v287
    %v343 = vpack.c.bf16 %v298, %v295
    %v344 = vpack.c.bf16 %v306, %v303
    %v345 = vpack.c.bf16 %v314, %v311
    %v346 = vpack.c.bf16 %v322, %v319
    %v347 = vpack.c.bf16 %v330, %v327
    %v348 = vpack.c.bf16 %v338, %v335
    %v350 = vlaneseq
    %v351 = vshrl.u32 %v350, 7
    %v352 = vsub.s32 0, %v351
    %v353 = vrot.slane %v147, %v352
    %v371 = vunpack.c.l.b16 %v99
    %v372 = vunpack.c.l.b16 %v100
    %v373 = vunpack.c.l.b16 %v101
    %v374 = vunpack.c.l.b16 %v102
    %v375 = vunpack.c.l.b16 %v103
    %v376 = vunpack.c.l.b16 %v104
    %v377 = vunpack.c.l.b16 %v105
    %v378 = vunpack.c.l.b16 %v106
    %v379 = vunpack.c.l.b16 %v107
    %v380 = vunpack.c.l.b16 %v108
    %v381 = vunpack.c.l.b16 %v109
    %v382 = vunpack.c.l.b16 %v110
    %v383 = vunpack.c.l.b16 %v111
    %v384 = vunpack.c.l.b16 %v112
    %v385 = vunpack.c.l.b16 %v113
    %v386 = vunpack.c.l.b16 %v114
    %v387 = vpack.c.b16 %v372, %v371
    %v388 = vpack.c.b16 %v374, %v373
    %v389 = vpack.c.b16 %v376, %v375
    %v390 = vpack.c.b16 %v378, %v377
    %v391 = vpack.c.b16 %v380, %v379
    %v392 = vpack.c.b16 %v382, %v381
    %v393 = vpack.c.b16 %v384, %v383
    %v394 = vpack.c.b16 %v386, %v385
    %403 = vmatprep.subr.bf16.mxu0 0
    %404 = vmatpush1.bf16.msra.mxu0 %v348
    %405 = vmatprep.subr.bf16.mxu0 0
    %406 = vmatpush1.bf16.msra.mxu0 %v347
    %407 = vmatprep.subr.bf16.mxu0 0
    %408 = vmatpush1.bf16.msra.mxu0 %v346
    %409 = vmatprep.subr.bf16.mxu0 0
    %410 = vmatpush1.bf16.msra.mxu0 %v345
    %411 = vmatprep.subr.bf16.mxu0 0
    %412 = vmatpush1.bf16.msra.mxu0 %v344
    %413 = vmatprep.subr.bf16.mxu0 0
    %414 = vmatpush1.bf16.msra.mxu0 %v343
    %415 = vmatprep.subr.bf16.mxu0 0
    %416 = vmatpush1.bf16.msra.mxu0 %v342
    %417 = vmatprep.subr.bf16.mxu0 0
    %418 = vmatpush1.bf16.msra.mxu0 %v341
    %419 = vmatprep.subr.bf16.mxu0 0
    %420 = vmatpush2.bf16.msra.mxu0 0
    %421 = vmatprep.subr.bf16.mxu0 0
    %422 = vmatpush2.bf16.msra.mxu0 0
    %423 = vmatprep.subr.bf16.mxu0 0
    %424 = vmatpush2.bf16.msra.mxu0 0
    %425 = vmatprep.subr.bf16.mxu0 0
    %426 = vmatpush2.bf16.msra.mxu0 0
    %427 = vmatprep.subr.bf16.mxu0 0
    %428 = vmatpush2.bf16.msra.mxu0 0
    %429 = vmatprep.subr.bf16.mxu0 0
    %430 = vmatpush2.bf16.msra.mxu0 0
    %431 = vmatprep.subr.bf16.mxu0 0
    %432 = vmatpush2.bf16.msra.mxu0 0
    %433 = vmatprep.subr.bf16.mxu0 0
    %434 = vmatpush2.bf16.msra.mxu0 0
    %435 = vmatprep.mubr.bf16.mxu0 0
    %436 = vmatmul.mubr.bf16.gmra.mxu0 %v387
    %v437 = vpop.f32.mrf.mxu0
    %v438 = vadd.f32 %v353, %v437
    %v439 = vpop.f32.mrf.mxu0
    %v440 = vpop.f32.mrf.mxu0
    %v441 = vadd.f32 %v353, %v440
    %v442 = vpop.f32.mrf.mxu0
    %443 = vmatprep.mubr.bf16.mxu0 0
    %444 = vmatmul.mubr.bf16.gmra.mxu0 %v388
    %v445 = vpop.f32.mrf.mxu0
    %v446 = vadd.f32 %v353, %v445
    %v447 = vpop.f32.mrf.mxu0
    %v448 = vpop.f32.mrf.mxu0
    %v449 = vadd.f32 %v353, %v448
    %v450 = vpop.f32.mrf.mxu0
    %451 = vmatprep.mubr.bf16.mxu0 0
    %452 = vmatmul.mubr.bf16.gmra.mxu0 %v389
    %v453 = vpop.f32.mrf.mxu0
    %v454 = vadd.f32 %v353, %v453
    %v455 = vpop.f32.mrf.mxu0
    %v456 = vpop.f32.mrf.mxu0
    %v457 = vadd.f32 %v353, %v456
    %v458 = vpop.f32.mrf.mxu0
    %459 = vmatprep.mubr.bf16.mxu0 0
    %460 = vmatmul.mubr.bf16.gmra.mxu0 %v390
    %v461 = vpop.f32.mrf.mxu0
    %v462 = vadd.f32 %v353, %v461
    %v463 = vpop.f32.mrf.mxu0
    %v464 = vpop.f32.mrf.mxu0
    %v465 = vadd.f32 %v353, %v464
    %v466 = vpop.f32.mrf.mxu0
    %467 = vmatprep.mubr.bf16.mxu0 0
    %468 = vmatmul.mubr.bf16.gmra.mxu0 %v391
    %v469 = vpop.f32.mrf.mxu0
    %v470 = vadd.f32 %v353, %v469
    %v471 = vpop.f32.mrf.mxu0
    %v472 = vpop.f32.mrf.mxu0
    %v473 = vadd.f32 %v353, %v472
    %v474 = vpop.f32.mrf.mxu0
    %475 = vmatprep.mubr.bf16.mxu0 0
    %476 = vmatmul.mubr.bf16.gmra.mxu0 %v392
    %v477 = vpop.f32.mrf.mxu0
    %v478 = vadd.f32 %v353, %v477
    %v479 = vpop.f32.mrf.mxu0
    %v480 = vpop.f32.mrf.mxu0
    %v481 = vadd.f32 %v353, %v480
    %v482 = vpop.f32.mrf.mxu0
    %483 = vmatprep.mubr.bf16.mxu0 0
    %484 = vmatmul.mubr.bf16.gmra.mxu0 %v393
    %v485 = vpop.f32.mrf.mxu0
    %v486 = vadd.f32 %v353, %v485
    %v487 = vpop.f32.mrf.mxu0
    %v488 = vpop.f32.mrf.mxu0
    %v489 = vadd.f32 %v353, %v488
    %v490 = vpop.f32.mrf.mxu0
    %491 = vmatprep.mubr.bf16.mxu0 0
    %492 = vmatmul.mubr.bf16.gmra.mxu0 %v394
    %v493 = vpop.f32.mrf.mxu0
    %v494 = vadd.f32 %v353, %v493
    %v495 = vpop.f32.mrf.mxu0
    %v496 = vpop.f32.mrf.mxu0
    %v497 = vadd.f32 %v353, %v496
    %v498 = vpop.f32.mrf.mxu0
    %499 = vdwg.mxu0
    %v500 = vmax.f32 %v438, 0.0
    %v501 = vmax.f32 %v441, 0.0
    %v502 = vmax.f32 %v446, 0.0
    %v503 = vmax.f32 %v449, 0.0
    %v504 = vmax.f32 %v454, 0.0
    %v505 = vmax.f32 %v457, 0.0
    %v506 = vmax.f32 %v462, 0.0
    %v507 = vmax.f32 %v465, 0.0
    %v508 = vmax.f32 %v470, 0.0
    %v509 = vmax.f32 %v473, 0.0
    %v510 = vmax.f32 %v478, 0.0
    %v511 = vmax.f32 %v481, 0.0
    %v512 = vmax.f32 %v486, 0.0
    %v513 = vmax.f32 %v489, 0.0
    %v514 = vmax.f32 %v494, 0.0
    %v515 = vmax.f32 %v497, 0.0
    %v516 = vpack.c.bf16 %v501, %v500
    %v517 = vpack.c.bf16 %v503, %v502
    %v518 = vpack.c.bf16 %v505, %v504
    %v519 = vpack.c.bf16 %v507, %v506
    %v520 = vpack.c.bf16 %v509, %v508
    %v521 = vpack.c.bf16 %v511, %v510
    %v522 = vpack.c.bf16 %v513, %v512
    %v523 = vpack.c.bf16 %v515, %v514
    %v524 = vld [vmem:[#allocation8] sm:$0xf]
    %v525 = vld [vmem:[#allocation8 + $0x4] sm:$0xf]
    %v526 = vld [vmem:[#allocation8 + $0x8] sm:$0xf]
    %v527 = vld [vmem:[#allocation8 + $0xc] sm:$0xf]
    %v528 = vld [vmem:[#allocation8 + $0x10] sm:$0xf]
    %v529 = vld [vmem:[#allocation8 + $0x14] sm:$0xf]
    %v530 = vld [vmem:[#allocation8 + $0x18] sm:$0xf]
    %v531 = vld [vmem:[#allocation8 + $0x1c] sm:$0xf]
    %v532 = vld [vmem:[#allocation8 + $0x20] sm:$0xf]
    %v533 = vld [vmem:[#allocation8 + $0x24] sm:$0xf]
    %v534 = vld [vmem:[#allocation8 + $0x28] sm:$0xf]
    %v535 = vld [vmem:[#allocation8 + $0x2c] sm:$0xf]
    %v536 = vld [vmem:[#allocation8 + $0x30] sm:$0xf]
    %v537 = vld [vmem:[#allocation8 + $0x34] sm:$0xf]
    %v538 = vld [vmem:[#allocation8 + $0x38] sm:$0xf]
    %v539 = vld [vmem:[#allocation8 + $0x3c] sm:$0xf]
    %v540 = vld [vmem:[%s5] sm:$0x1]
    %v557 = vunpack.c.l.b16 %v524
    %v558 = vunpack.c.l.b16 %v525
    %v559 = vunpack.c.l.b16 %v526
    %v560 = vunpack.c.l.b16 %v527
    %v561 = vunpack.c.l.b16 %v528
    %v562 = vunpack.c.l.b16 %v529
    %v563 = vunpack.c.l.b16 %v530
    %v564 = vunpack.c.l.b16 %v531
    %v565 = vunpack.c.l.b16 %v532
    %v566 = vunpack.c.l.b16 %v533
    %v567 = vunpack.c.l.b16 %v534
    %v568 = vunpack.c.l.b16 %v535
    %v569 = vunpack.c.l.b16 %v536
    %v570 = vunpack.c.l.b16 %v537
    %v571 = vunpack.c.l.b16 %v538
    %v572 = vunpack.c.l.b16 %v539
    %v573 = vpack.c.b16 %v558, %v557
    %v574 = vpack.c.b16 %v560, %v559
    %v575 = vpack.c.b16 %v562, %v561
    %v576 = vpack.c.b16 %v564, %v563
    %v577 = vpack.c.b16 %v566, %v565
    %v578 = vpack.c.b16 %v568, %v567
    %v579 = vpack.c.b16 %v570, %v569
    %v580 = vpack.c.b16 %v572, %v571
    %589 = vmatprep.subr.bf16.mxu0 0
    %590 = vmatpush1.bf16.msra.mxu0 %v580
    %591 = vmatprep.subr.bf16.mxu0 0
    %592 = vmatpush1.bf16.msra.mxu0 %v579
    %593 = vmatprep.subr.bf16.mxu0 0
    %594 = vmatpush1.bf16.msra.mxu0 %v578
    %595 = vmatprep.subr.bf16.mxu0 0
    %596 = vmatpush1.bf16.msra.mxu0 %v577
    %597 = vmatprep.subr.bf16.mxu0 0
    %598 = vmatpush1.bf16.msra.mxu0 %v576
    %599 = vmatprep.subr.bf16.mxu0 0
    %600 = vmatpush1.bf16.msra.mxu0 %v575
    %601 = vmatprep.subr.bf16.mxu0 0
    %602 = vmatpush1.bf16.msra.mxu0 %v574
    %603 = vmatprep.subr.bf16.mxu0 0
    %604 = vmatpush1.bf16.msra.mxu0 %v573
    %605 = vmatprep.subr.bf16.mxu0 0
    %606 = vmatpush2.bf16.msra.mxu0 0
    %607 = vmatprep.subr.bf16.mxu0 0
    %608 = vmatpush2.bf16.msra.mxu0 0
    %609 = vmatprep.subr.bf16.mxu0 0
    %610 = vmatpush2.bf16.msra.mxu0 0
    %611 = vmatprep.subr.bf16.mxu0 0
    %612 = vmatpush2.bf16.msra.mxu0 0
    %613 = vmatprep.subr.bf16.mxu0 0
    %614 = vmatpush2.bf16.msra.mxu0 0
    %615 = vmatprep.subr.bf16.mxu0 0
    %616 = vmatpush2.bf16.msra.mxu0 0
    %617 = vmatprep.subr.bf16.mxu0 0
    %618 = vmatpush2.bf16.msra.mxu0 0
    %619 = vmatprep.subr.bf16.mxu0 0
    %620 = vmatpush2.bf16.msra.mxu0 0
    %621 = vmatprep.mubr.bf16.mxu0 0
    %622 = vmatmul.mubr.bf16.gmra.mxu0 %v516
    %v623 = vpop.f32.mrf.mxu0
    %v624 = vadd.f32 0.0, %v623
    %v625 = vpop.f32.mrf.mxu0
    %v626 = vpop.f32.mrf.mxu0
    %v627 = vadd.f32 0.0, %v626
    %v628 = vpop.f32.mrf.mxu0
    %629 = vmatprep.mubr.bf16.mxu0 0
    %630 = vmatmul.mubr.bf16.gmra.mxu0 %v517
    %v631 = vpop.f32.mrf.mxu0
    %v632 = vadd.f32 0.0, %v631
    %v633 = vpop.f32.mrf.mxu0
    %v634 = vpop.f32.mrf.mxu0
    %v635 = vadd.f32 0.0, %v634
    %v636 = vpop.f32.mrf.mxu0
    %637 = vmatprep.mubr.bf16.mxu0 0
    %638 = vmatmul.mubr.bf16.gmra.mxu0 %v518
    %v639 = vpop.f32.mrf.mxu0
    %v640 = vadd.f32 0.0, %v639
    %v641 = vpop.f32.mrf.mxu0
    %v642 = vpop.f32.mrf.mxu0
    %v643 = vadd.f32 0.0, %v642
    %v644 = vpop.f32.mrf.mxu0
    %645 = vmatprep.mubr.bf16.mxu0 0
    %646 = vmatmul.mubr.bf16.gmra.mxu0 %v519
    %v647 = vpop.f32.mrf.mxu0
    %v648 = vadd.f32 0.0, %v647
    %v649 = vpop.f32.mrf.mxu0
    %v650 = vpop.f32.mrf.mxu0
    %v651 = vadd.f32 0.0, %v650
    %v652 = vpop.f32.mrf.mxu0
    %653 = vmatprep.mubr.bf16.mxu0 0
    %654 = vmatmul.mubr.bf16.gmra.mxu0 %v520
    %v655 = vpop.f32.mrf.mxu0
    %v656 = vadd.f32 0.0, %v655
    %v657 = vpop.f32.mrf.mxu0
    %v658 = vpop.f32.mrf.mxu0
    %v659 = vadd.f32 0.0, %v658
    %v660 = vpop.f32.mrf.mxu0
    %661 = vmatprep.mubr.bf16.mxu0 0
    %662 = vmatmul.mubr.bf16.gmra.mxu0 %v521
    %v663 = vpop.f32.mrf.mxu0
    %v664 = vadd.f32 0.0, %v663
    %v665 = vpop.f32.mrf.mxu0
    %v666 = vpop.f32.mrf.mxu0
    %v667 = vadd.f32 0.0, %v666
    %v668 = vpop.f32.mrf.mxu0
    %669 = vmatprep.mubr.bf16.mxu0 0
    %670 = vmatmul.mubr.bf16.gmra.mxu0 %v522
    %v671 = vpop.f32.mrf.mxu0
    %v672 = vadd.f32 0.0, %v671
    %v673 = vpop.f32.mrf.mxu0
    %v674 = vpop.f32.mrf.mxu0
    %v675 = vadd.f32 0.0, %v674
    %v676 = vpop.f32.mrf.mxu0
    %677 = vmatprep.mubr.bf16.mxu0 0
    %678 = vmatmul.mubr.bf16.gmra.mxu0 %v523
    %v679 = vpop.f32.mrf.mxu0
    %v680 = vadd.f32 0.0, %v679
    %v681 = vpop.f32.mrf.mxu0
    %v682 = vpop.f32.mrf.mxu0
    %v683 = vadd.f32 0.0, %v682
    %v684 = vpop.f32.mrf.mxu0
    %685 = vdwg.mxu0
    %v686 = vpack.c.bf16 %v627, %v624
    %v687 = vpack.c.bf16 %v635, %v632
    %v688 = vpack.c.bf16 %v643, %v640
    %v689 = vpack.c.bf16 %v651, %v648
    %v690 = vpack.c.bf16 %v659, %v656
    %v691 = vpack.c.bf16 %v667, %v664
    %v692 = vpack.c.bf16 %v675, %v672
    %v693 = vpack.c.bf16 %v683, %v680
    %v695 = vlaneseq
    %v696 = vshrl.u32 %v695, 7
    %v697 = vsub.s32 0, %v696
    %v698 = vrot.slane %v540, %v697
    %700 = vmatprep.subr.bf16.mxu0 0
    %701 = vmatpush1.bf16.msra.mxu0 %v693
    %702 = vmatprep.subr.bf16.mxu0 0
    %703 = vmatpush1.bf16.msra.mxu0 %v692
    %704 = vmatprep.subr.bf16.mxu0 0
    %705 = vmatpush1.bf16.msra.mxu0 %v691
    %706 = vmatprep.subr.bf16.mxu0 0
    %707 = vmatpush1.bf16.msra.mxu0 %v690
    %708 = vmatprep.subr.bf16.mxu0 0
    %709 = vmatpush1.bf16.msra.mxu0 %v689
    %710 = vmatprep.subr.bf16.mxu0 0
    %711 = vmatpush1.bf16.msra.mxu0 %v688
    %712 = vmatprep.subr.bf16.mxu0 0
    %713 = vmatpush1.bf16.msra.mxu0 %v687
    %714 = vmatprep.subr.bf16.mxu0 0
    %715 = vmatpush1.bf16.msra.mxu0 %v686
    %716 = vmatprep.subr.bf16.mxu0 0
    %717 = vmatpush2.bf16.msra.mxu0 0
    %718 = vmatprep.subr.bf16.mxu0 0
    %719 = vmatpush2.bf16.msra.mxu0 0
    %720 = vmatprep.subr.bf16.mxu0 0
    %721 = vmatpush2.bf16.msra.mxu0 0
    %722 = vmatprep.subr.bf16.mxu0 0
    %723 = vmatpush2.bf16.msra.mxu0 0
    %724 = vmatprep.subr.bf16.mxu0 0
    %725 = vmatpush2.bf16.msra.mxu0 0
    %726 = vmatprep.subr.bf16.mxu0 0
    %727 = vmatpush2.bf16.msra.mxu0 0
    %728 = vmatprep.subr.bf16.mxu0 0
    %729 = vmatpush2.bf16.msra.mxu0 0
    %730 = vmatprep.subr.bf16.mxu0 0
    %731 = vmatpush2.bf16.msra.mxu0 0
    %732 = vmatprep.mubr.bf16.mxu0 0
    %733 = vmatmul.mubr.bf16.gmra.mxu0 %v387
    %v734 = vpop.f32.mrf.mxu0
    %v735 = vadd.f32 %v698, %v734
    %v736 = vpop.f32.mrf.mxu0
    %v737 = vpop.f32.mrf.mxu0
    %v738 = vadd.f32 %v698, %v737
    %v739 = vpop.f32.mrf.mxu0
    %740 = vmatprep.mubr.bf16.mxu0 0
    %741 = vmatmul.mubr.bf16.gmra.mxu0 %v388
    %v742 = vpop.f32.mrf.mxu0
    %v743 = vadd.f32 %v698, %v742
    %v744 = vpop.f32.mrf.mxu0
    %v745 = vpop.f32.mrf.mxu0
    %v746 = vadd.f32 %v698, %v745
    %v747 = vpop.f32.mrf.mxu0
    %748 = vmatprep.mubr.bf16.mxu0 0
    %749 = vmatmul.mubr.bf16.gmra.mxu0 %v389
    %v750 = vpop.f32.mrf.mxu0
    %v751 = vadd.f32 %v698, %v750
    %v752 = vpop.f32.mrf.mxu0
    %v753 = vpop.f32.mrf.mxu0
    %v754 = vadd.f32 %v698, %v753
    %v755 = vpop.f32.mrf.mxu0
    %756 = vmatprep.mubr.bf16.mxu0 0
    %757 = vmatmul.mubr.bf16.gmra.mxu0 %v390
    %v758 = vpop.f32.mrf.mxu0
    %v759 = vadd.f32 %v698, %v758
    %v760 = vpop.f32.mrf.mxu0
    %v761 = vpop.f32.mrf.mxu0
    %v762 = vadd.f32 %v698, %v761
    %v763 = vpop.f32.mrf.mxu0
    %764 = vmatprep.mubr.bf16.mxu0 0
    %765 = vmatmul.mubr.bf16.gmra.mxu0 %v391
    %v766 = vpop.f32.mrf.mxu0
    %v767 = vadd.f32 %v698, %v766
    %v768 = vpop.f32.mrf.mxu0
    %v769 = vpop.f32.mrf.mxu0
    %v770 = vadd.f32 %v698, %v769
    %v771 = vpop.f32.mrf.mxu0
    %772 = vmatprep.mubr.bf16.mxu0 0
    %773 = vmatmul.mubr.bf16.gmra.mxu0 %v392
    %v774 = vpop.f32.mrf.mxu0
    %v775 = vadd.f32 %v698, %v774
    %v776 = vpop.f32.mrf.mxu0
    %v777 = vpop.f32.mrf.mxu0
    %v778 = vadd.f32 %v698, %v777
    %v779 = vpop.f32.mrf.mxu0
    %780 = vmatprep.mubr.bf16.mxu0 0
    %781 = vmatmul.mubr.bf16.gmra.mxu0 %v393
    %v782 = vpop.f32.mrf.mxu0
    %v783 = vadd.f32 %v698, %v782
    %v784 = vpop.f32.mrf.mxu0
    %v785 = vpop.f32.mrf.mxu0
    %v786 = vadd.f32 %v698, %v785
    %v787 = vpop.f32.mrf.mxu0
    %788 = vmatprep.mubr.bf16.mxu0 0
    %789 = vmatmul.mubr.bf16.gmra.mxu0 %v394
    %v790 = vpop.f32.mrf.mxu0
    %v791 = vadd.f32 %v698, %v790
    %v792 = vpop.f32.mrf.mxu0
    %v793 = vpop.f32.mrf.mxu0
    %v794 = vadd.f32 %v698, %v793
    %v795 = vpop.f32.mrf.mxu0
    %796 = vdwg.mxu0
    %v797 = vpack.c.bf16 %v738, %v735
    %v798 = vpack.c.bf16 %v746, %v743
    %v799 = vpack.c.bf16 %v754, %v751
    %v800 = vpack.c.bf16 %v762, %v759
    %v801 = vpack.c.bf16 %v770, %v767
    %v802 = vpack.c.bf16 %v778, %v775
    %v803 = vpack.c.bf16 %v786, %v783
    %v804 = vpack.c.bf16 %v794, %v791
    %v805 = vld [vmem:[#allocation10] sm:$0xff]
    %v806 = vld [vmem:[#allocation10 + $0x8] sm:$0xff]
    %v807 = vld [vmem:[#allocation10 + $0x10] sm:$0xff]
    %v808 = vld [vmem:[#allocation10 + $0x18] sm:$0xff]
    %v809 = vld [vmem:[#allocation10 + $0x20] sm:$0xff]
    %v810 = vld [vmem:[#allocation10 + $0x28] sm:$0xff]
    %v811 = vld [vmem:[#allocation10 + $0x30] sm:$0xff]
    %v812 = vld [vmem:[#allocation10 + $0x38] sm:$0xff]
    %v813 = vld [vmem:[#allocation10 + $0x40] sm:$0xff]
    %v814 = vld [vmem:[#allocation10 + $0x48] sm:$0xff]
    %v815 = vld [vmem:[#allocation10 + $0x50] sm:$0xff]
    %v816 = vld [vmem:[#allocation10 + $0x58] sm:$0xff]
    %v817 = vld [vmem:[#allocation10 + $0x60] sm:$0xff]
    %v818 = vld [vmem:[#allocation10 + $0x68] sm:$0xff]
    %v819 = vld [vmem:[#allocation10 + $0x70] sm:$0xff]
    %v820 = vld [vmem:[#allocation10 + $0x78] sm:$0xff]
    %v821 = vld [vmem:[#allocation10 + $0x80] sm:$0xff]
    %v822 = vld [vmem:[#allocation10 + $0x88] sm:$0xff]
    %v823 = vld [vmem:[#allocation10 + $0x90] sm:$0xff]
    %v824 = vld [vmem:[#allocation10 + $0x98] sm:$0xff]
    %v825 = vld [vmem:[#allocation10 + $0xa0] sm:$0xff]
    %v826 = vld [vmem:[#allocation10 + $0xa8] sm:$0xff]
    %v827 = vld [vmem:[#allocation10 + $0xb0] sm:$0xff]
    %v828 = vld [vmem:[#allocation10 + $0xb8] sm:$0xff]
    %v829 = vld [vmem:[#allocation10 + $0xc0] sm:$0xff]
    %v830 = vld [vmem:[#allocation10 + $0xc8] sm:$0xff]
    %v831 = vld [vmem:[#allocation10 + $0xd0] sm:$0xff]
    %v832 = vld [vmem:[#allocation10 + $0xd8] sm:$0xff]
    %v833 = vld [vmem:[#allocation10 + $0xe0] sm:$0xff]
    %v834 = vld [vmem:[#allocation10 + $0xe8] sm:$0xff]
    %v835 = vld [vmem:[#allocation10 + $0xf0] sm:$0xff]
    %v836 = vld [vmem:[#allocation10 + $0xf8] sm:$0xff]
    %v837 = vld [vmem:[%s7] sm:$0xf]
    %v839 = vlaneseq
    %v840 = vshrl.u32 %v839, 7
    %v841 = vsub.s32 0, %v840
    %v842 = vrot.slane %v837, %v841
    %v843 = vlaneseq
    %v844 = vshrl.u32 %v843, 7
    %v845 = vsub.s32 1, %v844
    %v846 = vrot.slane %v837, %v845
    %v847 = vlaneseq
    %v848 = vshrl.u32 %v847, 7
    %v849 = vsub.s32 2, %v848
    %v850 = vrot.slane %v837, %v849
    %v851 = vlaneseq
    %v852 = vshrl.u32 %v851, 7
    %v853 = vsub.s32 3, %v852
    %v854 = vrot.slane %v837, %v853
    %v891 = vunpack.c.l.b16 %v805
    %v892 = vunpack.c.h.b16 %v805
    %v893 = vunpack.c.l.b16 %v806
    %v894 = vunpack.c.h.b16 %v806
    %v895 = vunpack.c.l.b16 %v807
    %v896 = vunpack.c.h.b16 %v807
    %v897 = vunpack.c.l.b16 %v808
    %v898 = vunpack.c.h.b16 %v808
    %v899 = vunpack.c.l.b16 %v809
    %v900 = vunpack.c.h.b16 %v809
    %v901 = vunpack.c.l.b16 %v810
    %v902 = vunpack.c.h.b16 %v810
    %v903 = vunpack.c.l.b16 %v811
    %v904 = vunpack.c.h.b16 %v811
    %v905 = vunpack.c.l.b16 %v812
    %v906 = vunpack.c.h.b16 %v812
    %v907 = vunpack.c.l.b16 %v813
    %v908 = vunpack.c.h.b16 %v813
    %v909 = vunpack.c.l.b16 %v814
    %v910 = vunpack.c.h.b16 %v814
    %v911 = vunpack.c.l.b16 %v815
    %v912 = vunpack.c.h.b16 %v815
    %v913 = vunpack.c.l.b16 %v816
    %v914 = vunpack.c.h.b16 %v816
    %v915 = vunpack.c.l.b16 %v817
    %v916 = vunpack.c.h.b16 %v817
    %v917 = vunpack.c.l.b16 %v818
    %v918 = vunpack.c.h.b16 %v818
    %v919 = vunpack.c.l.b16 %v819
    %v920 = vunpack.c.h.b16 %v819
    %v921 = vunpack.c.l.b16 %v820
    %v922 = vunpack.c.h.b16 %v820
    %v923 = vunpack.c.l.b16 %v821
    %v924 = vunpack.c.h.b16 %v821
    %v925 = vunpack.c.l.b16 %v822
    %v926 = vunpack.c.h.b16 %v822
    %v927 = vunpack.c.l.b16 %v823
    %v928 = vunpack.c.h.b16 %v823
    %v929 = vunpack.c.l.b16 %v824
    %v930 = vunpack.c.h.b16 %v824
    %v931 = vunpack.c.l.b16 %v825
    %v932 = vunpack.c.h.b16 %v825
    %v933 = vunpack.c.l.b16 %v826
    %v934 = vunpack.c.h.b16 %v826
    %v935 = vunpack.c.l.b16 %v827
    %v936 = vunpack.c.h.b16 %v827
    %v937 = vunpack.c.l.b16 %v828
    %v938 = vunpack.c.h.b16 %v828
    %v939 = vunpack.c.l.b16 %v829
    %v940 = vunpack.c.h.b16 %v829
    %v941 = vunpack.c.l.b16 %v830
    %v942 = vunpack.c.h.b16 %v830
    %v943 = vunpack.c.l.b16 %v831
    %v944 = vunpack.c.h.b16 %v831
    %v945 = vunpack.c.l.b16 %v832
    %v946 = vunpack.c.h.b16 %v832
    %v947 = vunpack.c.l.b16 %v833
    %v948 = vunpack.c.h.b16 %v833
    %v949 = vunpack.c.l.b16 %v834
    %v950 = vunpack.c.h.b16 %v834
    %v951 = vunpack.c.l.b16 %v835
    %v952 = vunpack.c.h.b16 %v835
    %v953 = vunpack.c.l.b16 %v836
    %v954 = vunpack.c.h.b16 %v836
    %v955 = vpack.c.b16 %v895, %v891
    %v956 = vpack.c.b16 %v896, %v892
    %v957 = vpack.c.b16 %v897, %v893
    %v958 = vpack.c.b16 %v898, %v894
    %v959 = vpack.c.b16 %v903, %v899
    %v960 = vpack.c.b16 %v904, %v900
    %v961 = vpack.c.b16 %v905, %v901
    %v962 = vpack.c.b16 %v906, %v902
    %v963 = vpack.c.b16 %v911, %v907
    %v964 = vpack.c.b16 %v912, %v908
    %v965 = vpack.c.b16 %v913, %v909
    %v966 = vpack.c.b16 %v914, %v910
    %v967 = vpack.c.b16 %v919, %v915
    %v968 = vpack.c.b16 %v920, %v916
    %v969 = vpack.c.b16 %v921, %v917
    %v970 = vpack.c.b16 %v922, %v918
    %v971 = vpack.c.b16 %v927, %v923
    %v972 = vpack.c.b16 %v928, %v924
    %v973 = vpack.c.b16 %v929, %v925
    %v974 = vpack.c.b16 %v930, %v926
    %v975 = vpack.c.b16 %v935, %v931
    %v976 = vpack.c.b16 %v936, %v932
    %v977 = vpack.c.b16 %v937, %v933
    %v978 = vpack.c.b16 %v938, %v934
    %v979 = vpack.c.b16 %v943, %v939
    %v980 = vpack.c.b16 %v944, %v940
    %v981 = vpack.c.b16 %v945, %v941
    %v982 = vpack.c.b16 %v946, %v942
    %v983 = vpack.c.b16 %v951, %v947
    %v984 = vpack.c.b16 %v952, %v948
    %v985 = vpack.c.b16 %v953, %v949
    %v986 = vpack.c.b16 %v954, %v950
    %1019 = vmatprep.subr.bf16.mxu0 %v984
    %1020 = vmatpush1.bf16.msra.mxu0 %v983
    %1021 = vmatprep.subr.bf16.mxu0 %v980
    %1022 = vmatpush1.bf16.msra.mxu0 %v979
    %1023 = vmatprep.subr.bf16.mxu0 %v976
    %1024 = vmatpush1.bf16.msra.mxu0 %v975
    %1025 = vmatprep.subr.bf16.mxu0 %v972
    %1026 = vmatpush1.bf16.msra.mxu0 %v971
    %1027 = vmatprep.subr.bf16.mxu0 %v968
    %1028 = vmatpush1.bf16.msra.mxu0 %v967
    %1029 = vmatprep.subr.bf16.mxu0 %v964
    %1030 = vmatpush1.bf16.msra.mxu0 %v963
    %1031 = vmatprep.subr.bf16.mxu0 %v960
    %1032 = vmatpush1.bf16.msra.mxu0 %v959
    %1033 = vmatprep.subr.bf16.mxu0 %v956
    %1034 = vmatpush1.bf16.msra.mxu0 %v955
    %1035 = vmatprep.subr.bf16.mxu0 0
    %1036 = vmatpush2.bf16.msra.mxu0 0
    %1037 = vmatprep.subr.bf16.mxu0 0
    %1038 = vmatpush2.bf16.msra.mxu0 0
    %1039 = vmatprep.subr.bf16.mxu0 0
    %1040 = vmatpush2.bf16.msra.mxu0 0
    %1041 = vmatprep.subr.bf16.mxu0 0
    %1042 = vmatpush2.bf16.msra.mxu0 0
    %1043 = vmatprep.subr.bf16.mxu0 0
    %1044 = vmatpush2.bf16.msra.mxu0 0
    %1045 = vmatprep.subr.bf16.mxu0 0
    %1046 = vmatpush2.bf16.msra.mxu0 0
    %1047 = vmatprep.subr.bf16.mxu0 0
    %1048 = vmatpush2.bf16.msra.mxu0 0
    %1049 = vmatprep.subr.bf16.mxu0 0
    %1050 = vmatpush2.bf16.msra.mxu0 0
    %1051 = vmatprep.mubr.bf16.mxu0 0
    %1052 = vmatmul.mubr.bf16.gmra.mxu0 %v797
    %v1053 = vpop.f32.mrf.mxu0
    %v1054 = vadd.f32 %v842, %v1053
    %v1055 = vpop.f32.mrf.mxu0
    %v1056 = vadd.f32 %v846, %v1055
    %v1057 = vpop.f32.mrf.mxu0
    %v1058 = vadd.f32 %v842, %v1057
    %v1059 = vpop.f32.mrf.mxu0
    %v1060 = vadd.f32 %v846, %v1059
    %1061 = vmatprep.mubr.bf16.mxu0 0
    %1062 = vmatmul.mubr.bf16.gmra.mxu0 %v798
    %v1063 = vpop.f32.mrf.mxu0
    %v1064 = vadd.f32 %v842, %v1063
    %v1065 = vpop.f32.mrf.mxu0
    %v1066 = vadd.f32 %v846, %v1065
    %v1067 = vpop.f32.mrf.mxu0
    %v1068 = vadd.f32 %v842, %v1067
    %v1069 = vpop.f32.mrf.mxu0
    %v1070 = vadd.f32 %v846, %v1069
    %1071 = vmatprep.mubr.bf16.mxu0 0
    %1072 = vmatmul.mubr.bf16.gmra.mxu0 %v799
    %v1073 = vpop.f32.mrf.mxu0
    %v1074 = vadd.f32 %v842, %v1073
    %v1075 = vpop.f32.mrf.mxu0
    %v1076 = vadd.f32 %v846, %v1075
    %v1077 = vpop.f32.mrf.mxu0
    %v1078 = vadd.f32 %v842, %v1077
    %v1079 = vpop.f32.mrf.mxu0
    %v1080 = vadd.f32 %v846, %v1079
    %1081 = vmatprep.mubr.bf16.mxu0 0
    %1082 = vmatmul.mubr.bf16.gmra.mxu0 %v800
    %v1083 = vpop.f32.mrf.mxu0
    %v1084 = vadd.f32 %v842, %v1083
    %v1085 = vpop.f32.mrf.mxu0
    %v1086 = vadd.f32 %v846, %v1085
    %v1087 = vpop.f32.mrf.mxu0
    %v1088 = vadd.f32 %v842, %v1087
    %v1089 = vpop.f32.mrf.mxu0
    %v1090 = vadd.f32 %v846, %v1089
    %1091 = vmatprep.mubr.bf16.mxu0 0
    %1092 = vmatmul.mubr.bf16.gmra.mxu0 %v801
    %v1093 = vpop.f32.mrf.mxu0
    %v1094 = vadd.f32 %v842, %v1093
    %v1095 = vpop.f32.mrf.mxu0
    %v1096 = vadd.f32 %v846, %v1095
    %v1097 = vpop.f32.mrf.mxu0
    %v1098 = vadd.f32 %v842, %v1097
    %v1099 = vpop.f32.mrf.mxu0
    %v1100 = vadd.f32 %v846, %v1099
    %1101 = vmatprep.mubr.bf16.mxu0 0
    %1102 = vmatmul.mubr.bf16.gmra.mxu0 %v802
    %v1103 = vpop.f32.mrf.mxu0
    %v1104 = vadd.f32 %v842, %v1103
    %v1105 = vpop.f32.mrf.mxu0
    %v1106 = vadd.f32 %v846, %v1105
    %v1107 = vpop.f32.mrf.mxu0
    %v1108 = vadd.f32 %v842, %v1107
    %v1109 = vpop.f32.mrf.mxu0
    %v1110 = vadd.f32 %v846, %v1109
    %1111 = vmatprep.mubr.bf16.mxu0 0
    %1112 = vmatmul.mubr.bf16.gmra.mxu0 %v803
    %v1113 = vpop.f32.mrf.mxu0
    %v1114 = vadd.f32 %v842, %v1113
    %v1115 = vpop.f32.mrf.mxu0
    %v1116 = vadd.f32 %v846, %v1115
    %v1117 = vpop.f32.mrf.mxu0
    %v1118 = vadd.f32 %v842, %v1117
    %v1119 = vpop.f32.mrf.mxu0
    %v1120 = vadd.f32 %v846, %v1119
    %1121 = vmatprep.mubr.bf16.mxu0 0
    %1122 = vmatmul.mubr.bf16.gmra.mxu0 %v804
    %v1123 = vpop.f32.mrf.mxu0
    %v1124 = vadd.f32 %v842, %v1123
    %v1125 = vpop.f32.mrf.mxu0
    %v1126 = vadd.f32 %v846, %v1125
    %v1127 = vpop.f32.mrf.mxu0
    %v1128 = vadd.f32 %v842, %v1127
    %v1129 = vpop.f32.mrf.mxu0
    %v1130 = vadd.f32 %v846, %v1129
    %1131 = vdwg.mxu0
    %1132 = vmatprep.subr.bf16.mxu0 %v986
    %1133 = vmatpush1.bf16.msra.mxu0 %v985
    %1134 = vmatprep.subr.bf16.mxu0 %v982
    %1135 = vmatpush1.bf16.msra.mxu0 %v981
    %1136 = vmatprep.subr.bf16.mxu0 %v978
    %1137 = vmatpush1.bf16.msra.mxu0 %v977
    %1138 = vmatprep.subr.bf16.mxu0 %v974
    %1139 = vmatpush1.bf16.msra.mxu0 %v973
    %1140 = vmatprep.subr.bf16.mxu0 %v970
    %1141 = vmatpush1.bf16.msra.mxu0 %v969
    %1142 = vmatprep.subr.bf16.mxu0 %v966
    %1143 = vmatpush1.bf16.msra.mxu0 %v965
    %1144 = vmatprep.subr.bf16.mxu0 %v962
    %1145 = vmatpush1.bf16.msra.mxu0 %v961
    %1146 = vmatprep.subr.bf16.mxu0 %v958
    %1147 = vmatpush1.bf16.msra.mxu0 %v957
    %1148 = vmatprep.subr.bf16.mxu0 0
    %1149 = vmatpush2.bf16.msra.mxu0 0
    %1150 = vmatprep.subr.bf16.mxu0 0
    %1151 = vmatpush2.bf16.msra.mxu0 0
    %1152 = vmatprep.subr.bf16.mxu0 0
    %1153 = vmatpush2.bf16.msra.mxu0 0
    %1154 = vmatprep.subr.bf16.mxu0 0
    %1155 = vmatpush2.bf16.msra.mxu0 0
    %1156 = vmatprep.subr.bf16.mxu0 0
    %1157 = vmatpush2.bf16.msra.mxu0 0
    %1158 = vmatprep.subr.bf16.mxu0 0
    %1159 = vmatpush2.bf16.msra.mxu0 0
    %1160 = vmatprep.subr.bf16.mxu0 0
    %1161 = vmatpush2.bf16.msra.mxu0 0
    %1162 = vmatprep.subr.bf16.mxu0 0
    %1163 = vmatpush2.bf16.msra.mxu0 0
    %1164 = vmatprep.mubr.bf16.mxu0 0
    %1165 = vmatmul.mubr.bf16.gmra.mxu0 %v797
    %v1166 = vpop.f32.mrf.mxu0
    %v1167 = vadd.f32 %v850, %v1166
    %v1168 = vpop.f32.mrf.mxu0
    %v1169 = vadd.f32 %v854, %v1168
    %v1170 = vpop.f32.mrf.mxu0
    %v1171 = vadd.f32 %v850, %v1170
    %v1172 = vpop.f32.mrf.mxu0
    %v1173 = vadd.f32 %v854, %v1172
    %1174 = vmatprep.mubr.bf16.mxu0 0
    %1175 = vmatmul.mubr.bf16.gmra.mxu0 %v798
    %v1176 = vpop.f32.mrf.mxu0
    %v1177 = vadd.f32 %v850, %v1176
    %v1178 = vpop.f32.mrf.mxu0
    %v1179 = vadd.f32 %v854, %v1178
    %v1180 = vpop.f32.mrf.mxu0
    %v1181 = vadd.f32 %v850, %v1180
    %v1182 = vpop.f32.mrf.mxu0
    %v1183 = vadd.f32 %v854, %v1182
    %1184 = vmatprep.mubr.bf16.mxu0 0
    %1185 = vmatmul.mubr.bf16.gmra.mxu0 %v799
    %v1186 = vpop.f32.mrf.mxu0
    %v1187 = vadd.f32 %v850, %v1186
    %v1188 = vpop.f32.mrf.mxu0
    %v1189 = vadd.f32 %v854, %v1188
    %v1190 = vpop.f32.mrf.mxu0
    %v1191 = vadd.f32 %v850, %v1190
    %v1192 = vpop.f32.mrf.mxu0
    %v1193 = vadd.f32 %v854, %v1192
    %1194 = vmatprep.mubr.bf16.mxu0 0
    %1195 = vmatmul.mubr.bf16.gmra.mxu0 %v800
    %v1196 = vpop.f32.mrf.mxu0
    %v1197 = vadd.f32 %v850, %v1196
    %v1198 = vpop.f32.mrf.mxu0
    %v1199 = vadd.f32 %v854, %v1198
    %v1200 = vpop.f32.mrf.mxu0
    %v1201 = vadd.f32 %v850, %v1200
    %v1202 = vpop.f32.mrf.mxu0
    %v1203 = vadd.f32 %v854, %v1202
    %1204 = vmatprep.mubr.bf16.mxu0 0
    %1205 = vmatmul.mubr.bf16.gmra.mxu0 %v801
    %v1206 = vpop.f32.mrf.mxu0
    %v1207 = vadd.f32 %v850, %v1206
    %v1208 = vpop.f32.mrf.mxu0
    %v1209 = vadd.f32 %v854, %v1208
    %v1210 = vpop.f32.mrf.mxu0
    %v1211 = vadd.f32 %v850, %v1210
    %v1212 = vpop.f32.mrf.mxu0
    %v1213 = vadd.f32 %v854, %v1212
    %1214 = vmatprep.mubr.bf16.mxu0 0
    %1215 = vmatmul.mubr.bf16.gmra.mxu0 %v802
    %v1216 = vpop.f32.mrf.mxu0
    %v1217 = vadd.f32 %v850, %v1216
    %v1218 = vpop.f32.mrf.mxu0
    %v1219 = vadd.f32 %v854, %v1218
    %v1220 = vpop.f32.mrf.mxu0
    %v1221 = vadd.f32 %v850, %v1220
    %v1222 = vpop.f32.mrf.mxu0
    %v1223 = vadd.f32 %v854, %v1222
    %1224 = vmatprep.mubr.bf16.mxu0 0
    %1225 = vmatmul.mubr.bf16.gmra.mxu0 %v803
    %v1226 = vpop.f32.mrf.mxu0
    %v1227 = vadd.f32 %v850, %v1226
    %v1228 = vpop.f32.mrf.mxu0
    %v1229 = vadd.f32 %v854, %v1228
    %v1230 = vpop.f32.mrf.mxu0
    %v1231 = vadd.f32 %v850, %v1230
    %v1232 = vpop.f32.mrf.mxu0
    %v1233 = vadd.f32 %v854, %v1232
    %1234 = vmatprep.mubr.bf16.mxu0 0
    %1235 = vmatmul.mubr.bf16.gmra.mxu0 %v804
    %v1236 = vpop.f32.mrf.mxu0
    %v1237 = vadd.f32 %v850, %v1236
    %v1238 = vpop.f32.mrf.mxu0
    %v1239 = vadd.f32 %v854, %v1238
    %v1240 = vpop.f32.mrf.mxu0
    %v1241 = vadd.f32 %v850, %v1240
    %v1242 = vpop.f32.mrf.mxu0
    %v1243 = vadd.f32 %v854, %v1242
    %1244 = vdwg.mxu0
    %1245 = vst [vmem:[#allocation11] sm:$0xff] %v1054
    %1246 = vst [vmem:[#allocation11 + $0x8] sm:$0xff] %v1056
    %1247 = vst [vmem:[#allocation11 + $0x10] sm:$0xff] %v1167
    %1248 = vst [vmem:[#allocation11 + $0x18] sm:$0xff] %v1169
    %1249 = vst [vmem:[#allocation11 + $0x20] sm:$0xff] %v1058
    %1250 = vst [vmem:[#allocation11 + $0x28] sm:$0xff] %v1060
    %1251 = vst [vmem:[#allocation11 + $0x30] sm:$0xff] %v1171
    %1252 = vst [vmem:[#allocation11 + $0x38] sm:$0xff] %v1173
    %1253 = vst [vmem:[#allocation11 + $0x40] sm:$0xff] %v1064
    %1254 = vst [vmem:[#allocation11 + $0x48] sm:$0xff] %v1066
    %1255 = vst [vmem:[#allocation11 + $0x50] sm:$0xff] %v1177
    %1256 = vst [vmem:[#allocation11 + $0x58] sm:$0xff] %v1179
    %1257 = vst [vmem:[#allocation11 + $0x60] sm:$0xff] %v1068
    %1258 = vst [vmem:[#allocation11 + $0x68] sm:$0xff] %v1070
    %1259 = vst [vmem:[#allocation11 + $0x70] sm:$0xff] %v1181
    %1260 = vst [vmem:[#allocation11 + $0x78] sm:$0xff] %v1183
    %1261 = vst [vmem:[#allocation11 + $0x80] sm:$0xff] %v1074
    %1262 = vst [vmem:[#allocation11 + $0x88] sm:$0xff] %v1076
    %1263 = vst [vmem:[#allocation11 + $0x90] sm:$0xff] %v1187
    %1264 = vst [vmem:[#allocation11 + $0x98] sm:$0xff] %v1189
    %1265 = vst [vmem:[#allocation11 + $0xa0] sm:$0xff] %v1078
    %1266 = vst [vmem:[#allocation11 + $0xa8] sm:$0xff] %v1080
    %1267 = vst [vmem:[#allocation11 + $0xb0] sm:$0xff] %v1191
    %1268 = vst [vmem:[#allocation11 + $0xb8] sm:$0xff] %v1193
    %1269 = vst [vmem:[#allocation11 + $0xc0] sm:$0xff] %v1084
    %1270 = vst [vmem:[#allocation11 + $0xc8] sm:$0xff] %v1086
    %1271 = vst [vmem:[#allocation11 + $0xd0] sm:$0xff] %v1197
    %1272 = vst [vmem:[#allocation11 + $0xd8] sm:$0xff] %v1199
    %1273 = vst [vmem:[#allocation11 + $0xe0] sm:$0xff] %v1088
    %1274 = vst [vmem:[#allocation11 + $0xe8] sm:$0xff] %v1090
    %1275 = vst [vmem:[#allocation11 + $0xf0] sm:$0xff] %v1201
    %1276 = vst [vmem:[#allocation11 + $0xf8] sm:$0xff] %v1203
    %1277 = vst [vmem:[#allocation11 + $0x100] sm:$0xff] %v1094
    %1278 = vst [vmem:[#allocation11 + $0x108] sm:$0xff] %v1096
    %1279 = vst [vmem:[#allocation11 + $0x110] sm:$0xff] %v1207
    %1280 = vst [vmem:[#allocation11 + $0x118] sm:$0xff] %v1209
    %1281 = vst [vmem:[#allocation11 + $0x120] sm:$0xff] %v1098
    %1282 = vst [vmem:[#allocation11 + $0x128] sm:$0xff] %v1100
    %1283 = vst [vmem:[#allocation11 + $0x130] sm:$0xff] %v1211
    %1284 = vst [vmem:[#allocation11 + $0x138] sm:$0xff] %v1213
    %1285 = vst [vmem:[#allocation11 + $0x140] sm:$0xff] %v1104
    %1286 = vst [vmem:[#allocation11 + $0x148] sm:$0xff] %v1106
    %1287 = vst [vmem:[#allocation11 + $0x150] sm:$0xff] %v1217
    %1288 = vst [vmem:[#allocation11 + $0x158] sm:$0xff] %v1219
    %1289 = vst [vmem:[#allocation11 + $0x160] sm:$0xff] %v1108
    %1290 = vst [vmem:[#allocation11 + $0x168] sm:$0xff] %v1110
    %1291 = vst [vmem:[#allocation11 + $0x170] sm:$0xff] %v1221
    %1292 = vst [vmem:[#allocation11 + $0x178] sm:$0xff] %v1223
    %1293 = vst [vmem:[#allocation11 + $0x180] sm:$0xff] %v1114
    %1294 = vst [vmem:[#allocation11 + $0x188] sm:$0xff] %v1116
    %1295 = vst [vmem:[#allocation11 + $0x190] sm:$0xff] %v1227
    %1296 = vst [vmem:[#allocation11 + $0x198] sm:$0xff] %v1229
    %1297 = vst [vmem:[#allocation11 + $0x1a0] sm:$0xff] %v1118
    %1298 = vst [vmem:[#allocation11 + $0x1a8] sm:$0xff] %v1120
    %1299 = vst [vmem:[#allocation11 + $0x1b0] sm:$0xff] %v1231
    %1300 = vst [vmem:[#allocation11 + $0x1b8] sm:$0xff] %v1233
    %1301 = vst [vmem:[#allocation11 + $0x1c0] sm:$0xff] %v1124
    %1302 = vst [vmem:[#allocation11 + $0x1c8] sm:$0xff] %v1126
    %1303 = vst [vmem:[#allocation11 + $0x1d0] sm:$0xff] %v1237
    %1304 = vst [vmem:[#allocation11 + $0x1d8] sm:$0xff] %v1239
    %1305 = vst [vmem:[#allocation11 + $0x1e0] sm:$0xff] %v1128
    %1306 = vst [vmem:[#allocation11 + $0x1e8] sm:$0xff] %v1130
    %1307 = vst [vmem:[#allocation11 + $0x1f0] sm:$0xff] %v1241
    %1308 = vst [vmem:[#allocation11 + $0x1f8] sm:$0xff] %v1243
    // Predicated region
    $region54: #{tpu_custom_call.1} parent=1 // pred_check
      _
    $region55: #{tpu_custom_call.1} parent=1 // pred_check_branch
      %1310 = sbr.rel (0) target = $region57
    $region56: #{tpu_custom_call.1} parent=1 // pred_region
      %s1312 = ssub.s32 8192, 8192
      %1313 = vsyncadd [#allocation4], %s1312
      %s1314 = sshll.u32 [#allocation11], 4
      %s1315 = int_to_ptr.vmem [resolvable:$true] %s1314
      %1320 = dma.vmem_to_hbm [thread:$0]  %s1315, 8192, %s8, [#allocation4], 512, 512, 32
    $region57: #{tpu_custom_call.1} parent=1 // pred_fallthru
      _
    // Predicated region
    $region58: #{tpu_custom_call.1} parent=1 // pred_check
      _
    $region59: #{tpu_custom_call.1} parent=1 // pred_check_branch
      %1322 = sbr.rel (0) target = $region61
    $region60: #{tpu_custom_call.1} parent=1 // pred_region
      %1323 = dma.done [#allocation4], 8192
    $region61: #{tpu_custom_call.1} parent=1 // pred_fallthru
      _
    %1324 = vsyncpa [#allocation3], 1
    %1325 = vsyncpa [#allocation6], 1
    %1326 = vsyncpa [#allocation9], 1
    %1327 = vsyncpa [#allocation4], 1

</llo_original>
